<compile_context>
chip_gen: v5e
topology: v5e:2x2
jax: 0.10.0
libtpu: 0.0.40
codegen_flags: <defaults>
</compile_context>

<pallas_src>
import numpy as np
import jax
import jax.numpy as jnp
from jax.experimental import pallas as pl
from jax.experimental.pallas import tpu as pltpu

EPSILON = 1e-6
# TODO(synk): CLIP_DIV_PRED_MIN is imported in the original module but its value is
# not shown in the spec; 1e-2 is used here — verify against the source constant.
CLIP_DIV_PRED_MIN = 1e-2

LANE = 128                     # vreg lanes: last dim of every block
SUBLANES = 8                   # f32 vreg sublanes: row-axis alignment unit
SMALL_N_FALLBACK = 16 * 1024   # below this, one fused XLA elementwise op beats a kernel launch


def _tile_rows(num_streams: int) -> int:
    """Rows per block: ~2 MiB/stream when only pred/out are streamed, ~1 MiB/stream
    when 3-4 streams are live. Keeps double-buffered VMEM (streams x 2 x block)
    <= 16 MiB (v5e scoped default, well under v6e/v7x budgets) while amortizing
    the ~0.35 us per-grid-step fixed cost on all generations."""
    return 4096 if num_streams <= 2 else 2048


def _make_norm_kernel(subt_is_vec, inv_is_vec, subt_c, inv_c):
    """Build the elementwise kernel. Host-known scalar operands are baked in as
    Python-float literals (no SMEM plumbing, no N-length constant streams)."""
    if subt_is_vec and inv_is_vec:
        def kernel(pred_ref, subt_ref, inv_ref, out_ref):
            out_ref[...] = (pred_ref[...] - subt_ref[...]) * inv_ref[...]
    elif subt_is_vec:
        def kernel(pred_ref, subt_ref, out_ref):
            out_ref[...] = (pred_ref[...] - subt_ref[...]) * inv_c
    elif inv_is_vec:
        if subt_c == 0.0:
            def kernel(pred_ref, inv_ref, out_ref):
                out_ref[...] = pred_ref[...] * inv_ref[...]
        else:
            def kernel(pred_ref, inv_ref, out_ref):
                out_ref[...] = (pred_ref[...] - subt_c) * inv_ref[...]
    else:
        if subt_c == 0.0:
            def kernel(pred_ref, out_ref):
                out_ref[...] = pred_ref[...] * inv_c
        else:
            def kernel(pred_ref, out_ref):
                out_ref[...] = (pred_ref[...] - subt_c) * inv_c
    return kernel


def _norm_pallas(kernel, pred2d, vec_consts, tile_rows):
    rows = pred2d.shape[0]                      # rows is always a multiple of 8
    tile_rows = min(tile_rows, rows)            # full-extent block for moderate n
    spec = pl.BlockSpec((tile_rows, LANE), lambda i: (i, 0))
    return pl.pallas_call(
        kernel,
        out_shape=jax.ShapeDtypeStruct((rows, LANE), jnp.float32),
        grid_spec=pltpu.PrefetchScalarGridSpec(
            num_scalar_prefetch=0,
            grid=(pl.cdiv(rows, tile_rows),),   # partial final block handled by Pallas
            in_specs=[spec] * (1 + len(vec_consts)),
            out_specs=spec,
        ),
        compiler_params=pltpu.CompilerParams(
            # shards the row-tile axis across both TensorCores on v7x; no-op on v5e/v6e
            dimension_semantics=("parallel",),
        ),
    )(pred2d, *vec_consts)


class ObjectiveBase:
    """JAX/Pallas port of ObjectiveABC (normalization path)."""

    def __init__(self, subt_pred=None, div_pred=None, clip_div_pred_min=CLIP_DIV_PRED_MIN):
        div = (np.clip(np.asarray(div_pred, dtype=np.float32),
                       a_min=clip_div_pred_min, a_max=None)
               if div_pred is not None else np.float32(1.0))
        subt = (np.asarray(subt_pred, dtype=np.float32)
                if subt_pred is not None else np.float32(0.0))
        inv = (np.float32(1.0) / (div + np.float32(EPSILON))).astype(np.float32)

        # Mirrors of the torch buffers (used by _check_clust_assignments / fallback).
        self._div_pred = jnp.asarray(div)
        self._subt_pred = jnp.asarray(subt)
        self._inv_div = jnp.asarray(inv)

        self._subt_is_vec = np.ndim(subt) > 0
        self._div_is_vec = np.ndim(div) > 0
        subt_c = 0.0 if self._subt_is_vec else float(subt)
        inv_c = 1.0 if self._div_is_vec else float(inv)
        self._kernel = _make_norm_kernel(self._subt_is_vec, self._div_is_vec, subt_c, inv_c)
        # pred + out are always streamed; vector constants add streams.
        self._num_streams = 2 + int(self._subt_is_vec) + int(self._div_is_vec)

        # Cache of padded (rows, 128) constant slabs. Vector constants have one fixed
        # length, so this holds at most one entry in practice (no unbounded growth).
        self._slab_cache = {}

    # ---- layout helpers -------------------------------------------------
    @staticmethod
    def _rows_for(n):
        rows = -(-n // LANE)
        return -(-rows // SUBLANES) * SUBLANES          # <= 1023 padded elements total

    @staticmethod
    def _to_slab(v, n, rows_pad):
        n_pad = rows_pad * LANE
        v = jnp.asarray(v, jnp.float32).reshape(-1)
        if n_pad != n:
            v = jnp.pad(v, (0, n_pad - n))
        return v.reshape(rows_pad, LANE)

    def _const_slabs(self, n, rows_pad):
        key = (n, rows_pad)
        if key not in self._slab_cache:
            slabs = []
            if self._subt_is_vec:
                slabs.append(self._to_slab(self._subt_pred, n, rows_pad))
            if self._div_is_vec:
                slabs.append(self._to_slab(self._inv_div, n, rows_pad))
            self._slab_cache[key] = tuple(slabs)
        return self._slab_cache[key]

    # ---- normalization --------------------------------------------------
    def _norm(self, pred):
        pred = jnp.asarray(pred, jnp.float32)
        if pred.ndim != 1 or pred.size < SMALL_N_FALLBACK:
            # Small / non-1D inputs: a single fused XLA elementwise op beats the
            # pallas_call launch + wrapper cost in this regime.
            return (pred - self._subt_pred) / (self._div_pred + EPSILON)

        n = pred.shape[0]
        rows_pad = self._rows_for(n)
        n_pad = rows_pad * LANE
        if n_pad == n:
            pred2d = pred.reshape(rows_pad, LANE)       # metadata-only reshape, no copy
        else:
            # one pad of <= 1023 elements for ragged n (single extra copy, unavoidable)
            pred2d = jnp.pad(pred, (0, n_pad - n)).reshape(rows_pad, LANE)

        vec_consts = self._const_slabs(n, rows_pad)
        out2d = _norm_pallas(self._kernel, pred2d, vec_consts,
                             _tile_rows(self._num_streams))
        out = out2d.reshape(-1)
        return out if n_pad == n else out[:n]

    # ---- misc ------------------------------------------------------------
    def _check_clust_assignments(self, clust_assignments):
        if self._div_pred.ndim > 0 and len(clust_assignments) != self._div_pred.shape[0]:
            raise ValueError(
                f"clust_assignments and div_pred must have the same length. "
                f"Got {len(clust_assignments)} and {self._div_pred.shape[0]}")
        if self._subt_pred.ndim > 0 and len(clust_assignments) != self._subt_pred.shape[0]:
            raise ValueError(
                f"clust_assignments and subt_pred must have the same length. "
                f"Got {len(clust_assignments)} and {self._subt_pred.shape[0]}")

    def forward(self, unit_scores):
        # TODO(synk): forward is @abstractmethod in ObjectiveABC; only the _norm hot path is kernelized.
        raise NotImplementedError

    def set_clusters(self, *args, **kwargs):
        # TODO(synk): set_clusters is @abstractmethod in ObjectiveABC; no concrete semantics to port.
        raise NotImplementedError


if __name__ == "__main__":
    key = jax.random.PRNGKey(0)
    k1, k2, k3, k4, k5, k6 = jax.random.split(key, 6)

    # 1) small n (vector subt/div) -> fused-jnp fallback path
    n_small = 200
    x_s = jax.random.normal(k1, (n_small,), dtype=jnp.float32)
    subt_s = jax.random.normal(k2, (n_small,), dtype=jnp.float32)
    div_s = jax.random.uniform(k3, (n_small,), dtype=jnp.float32, minval=-0.5, maxval=2.0)
    obj_s = ObjectiveBase(subt_pred=np.asarray(subt_s), div_pred=np.asarray(div_s))
    out_s = jax.block_until_ready(obj_s._norm(x_s))
    ref_s = (x_s - obj_s._subt_pred) / (obj_s._div_pred + EPSILON)
    np.testing.assert_allclose(np.asarray(out_s), np.asarray(ref_s), rtol=1e-5, atol=1e-5)

    # 2) large n, both constants vectors -> Pallas, 2 x (2048,128) blocks, ragged tail padding
    n_vec = 300_000
    x_v = jax.random.normal(k4, (n_vec,), dtype=jnp.float32)
    subt_v = jax.random.normal(k5, (n_vec,), dtype=jnp.float32)
    div_v = jax.random.uniform(k6, (n_vec,), dtype=jnp.float32, minval=-0.5, maxval=2.0)
    obj_v = ObjectiveBase(subt_pred=np.asarray(subt_v), div_pred=np.asarray(div_v))
    out_v = jax.block_until_ready(obj_v._norm(x_v))
    ref_v = (x_v - obj_v._subt_pred) / (obj_v._div_pred + EPSILON)
    np.testing.assert_allclose(np.asarray(out_v), np.asarray(ref_v), rtol=1e-5, atol=1e-5)
    # second call reuses the cached constant slabs
    out_v2 = jax.block_until_ready(obj_v._norm(x_v))
    np.testing.assert_allclose(np.asarray(out_v2), np.asarray(ref_v), rtol=1e-5, atol=1e-5)

    # 3) mixed: scalar subt (default 0, elided), vector div -> only the vector operand streamed
    n_mix = 262_144  # rows=2048 exactly: zero-copy reshape, no pad, no output slice
    x_m = jax.random.normal(k1, (n_mix,), dtype=jnp.float32)
    div_m = jax.random.uniform(k2, (n_mix,), dtype=jnp.float32, minval=-0.5, maxval=2.0)
    obj_m = ObjectiveBase(div_pred=np.asarray(div_m))
    out_m = jax.block_until_ready(obj_m._norm(x_m))
    ref_m = x_m / (obj_m._div_pred + EPSILON)
    np.testing.assert_allclose(np.asarray(out_m), np.asarray(ref_m), rtol=1e-5, atol=1e-5)

    # 4) default scalar subt/div -> literals baked into the kernel, 2 streams, (4096,128) blocks
    n_def = 600_000
    x_d = jax.random.normal(k3, (n_def,), dtype=jnp.float32)
    obj_d = ObjectiveBase()
    out_d = jax.block_until_ready(obj_d._norm(x_d))
    ref_d = x_d / (1.0 + EPSILON)
    np.testing.assert_allclose(np.asarray(out_d), np.asarray(ref_d), rtol=1e-5, atol=1e-5)

    print("KERNEL_OK")
</pallas_src>

<mosaic_0001>
module attributes {stable_mosaic.version = 11 : i64} {
  func.func @kernel(%arg0: i32, %arg1: memref<2048x128xf32, #tpu.memory_space<vmem>>, %arg2: memref<2048x128xf32, #tpu.memory_space<vmem>>, %arg3: memref<2048x128xf32, #tpu.memory_space<vmem>>, %arg4: memref<2048x128xf32, #tpu.memory_space<vmem>>) attributes {dimension_semantics = [#tpu.dimension_semantics<parallel>], iteration_bounds = array<i64: 2>, scalar_prefetch = 0 : i64, scratch_operands = 0 : i64, tpu.core_type = #tpu.core_type<tc>, window_params = [{transform_indices = @transform_0, window_bounds = array<i64: 2048, 128>}, {transform_indices = @transform_1, window_bounds = array<i64: 2048, 128>}, {transform_indices = @transform_2, window_bounds = array<i64: 2048, 128>}, {transform_indices = @transform_3, window_bounds = array<i64: 2048, 128>}]} {
    %c0 = arith.constant 0 : index
    %c0_0 = arith.constant 0 : index
    %0 = vector.load %arg1[%c0, %c0_0] : memref<2048x128xf32, #tpu.memory_space<vmem>>, vector<2048x128xf32>
    %c0_1 = arith.constant 0 : index
    %c0_2 = arith.constant 0 : index
    %1 = vector.load %arg2[%c0_1, %c0_2] : memref<2048x128xf32, #tpu.memory_space<vmem>>, vector<2048x128xf32>
    %2 = arith.subf %0, %1 : vector<2048x128xf32>
    %c0_3 = arith.constant 0 : index
    %c0_4 = arith.constant 0 : index
    %3 = vector.load %arg3[%c0_3, %c0_4] : memref<2048x128xf32, #tpu.memory_space<vmem>>, vector<2048x128xf32>
    %4 = arith.mulf %2, %3 : vector<2048x128xf32>
    %c0_5 = arith.constant 0 : index
    %c0_6 = arith.constant 0 : index
    %5 = vector.load %arg4[%c0_5, %c0_6] : memref<2048x128xf32, #tpu.memory_space<vmem>>, vector<2048x128xf32>
    tpu.vector_store %arg4[%c0_5, %c0_6], %4 {strides = array<i32>} : memref<2048x128xf32, #tpu.memory_space<vmem>>, vector<2048x128xf32>,
    return
  }
  func.func @transform_0(%arg0: i32) -> (i32, i32) {
    %c0_i32 = arith.constant 0 : i32
    %c0_i32_0 = arith.constant 0 : i32
    return %arg0, %c0_i32 : i32, i32
  }
  func.func @transform_1(%arg0: i32) -> (i32, i32) {
    %c0_i32 = arith.constant 0 : i32
    %c0_i32_0 = arith.constant 0 : i32
    return %arg0, %c0_i32 : i32, i32
  }
  func.func @transform_2(%arg0: i32) -> (i32, i32) {
    %c0_i32 = arith.constant 0 : i32
    %c0_i32_0 = arith.constant 0 : i32
    return %arg0, %c0_i32 : i32, i32
  }
  func.func @transform_3(%arg0: i32) -> (i32, i32) {
    %c0_i32 = arith.constant 0 : i32
    %c0_i32_0 = arith.constant 0 : i32
    return %arg0, %c0_i32 : i32, i32
  }
}

</mosaic_0001>

<llo_original>
// kernel: tpu_custom_call.1
$region0: #{tpu_custom_call.1}
  #allocation0 [shape = 'u32[]', space=smem, size = 0x4, offset = 0x4, fixed_abs, tag = 'smem constant byte address 0x4 - core index']
  #allocation1 [shape = 'u32[72,128]{1,0:T(1,128)}', space=vmem, size = 0x9000, scoped, tag = 'internal scratch']
  %s0 = inlined_call_operand.hbm [shape: f32[2344,128], index: 0, kind: input, shape index: {}]
  %s1 = inlined_call_operand.hbm [shape: f32[2344,128], index: 1, kind: input, shape index: {}]
  %s2 = inlined_call_operand.hbm [shape: f32[2344,128], index: 2, kind: input, shape index: {}]
  %s3 = inlined_call_operand.hbm [shape: f32[2344,128], index: 3, kind: output, shape index: {}]
  %s4 = sld [smem:[#allocation0]]
  $region57: #{tpu_custom_call.1} parent=0
    _
  %s6 = ssub.s32 1, %s4
  %s7 = scalar_select 0, %s6, %s4
  $region1: #{tpu_custom_call.1} parent=0
    #allocation2 [shape = 'u8[2097152]{0}', space=vmem, size = 0x200000, scoped, tag = 'input window, operand 0']
    #allocation3 [shape = 's32[2]{0}', space=sflag, size = 0x8, scoped, tag = 'scoped memory for tpu_custom_call.1']
    #allocation4 [shape = 's32[2]{0}', space=sflag, size = 0x8, scoped, tag = 'scoped memory for tpu_custom_call.1']
    #allocation5 [shape = 'u8[2097152]{0}', space=vmem, size = 0x200000, scoped, tag = 'input window, operand 1']
    #allocation6 [shape = 's32[2]{0}', space=sflag, size = 0x8, scoped, tag = 'scoped memory for tpu_custom_call.1']
    #allocation7 [shape = 'u8[2097152]{0}', space=vmem, size = 0x200000, scoped, tag = 'input window, operand 2']
    #allocation8 [shape = 'u8[2097152]{0}', space=vmem, size = 0x200000, scoped, tag = 'output window, operand 0']
    %8 = vsyncpa [#allocation3], 0
    %s9 = scalar_lea.sflag [#allocation3], 1
    %10 = vsyncpa %s9, 0
    %11 = vsyncpa [#allocation6], 0
    %s12 = scalar_lea.sflag [#allocation6], 1
    %13 = vsyncpa %s12, 0
    %14 = vsyncpa [#allocation4], 0
    %s15 = scalar_lea.sflag [#allocation4], 1
    %16 = vsyncpa %s15, 0
    loop: start=0, step=1, limit=4
    $region2: #{tpu_custom_call.1} parent=1 // loop_pre_header
      _
    $region3: #{tpu_custom_call.1} parent=1 // loop_header
      %s18 = sphi 0, %s22
      %p19 = scmp.ge.s32.totalorder %s18, 4
      %s28 = sphi 0, %s30
      %s31 = sphi 0, %s28
      %s32 = sphi 0, %s31
      %s48 = sphi 0, %s32
      %s54 = sphi 0, %s56
      %s57 = sphi 0, %s54
      %s58 = sphi 0, %s57
      %s74 = sphi 0, %s58
      %s80 = sphi 0, %s82
      %s83 = sphi 0, %s80
      %s84 = sphi 0, %s83
      %s100 = sphi 0, %s84
      %s106 = sphi 0, %s108
      %s109 = sphi 0, %s106
      %s110 = sphi 0, %s109
      %s126 = sphi 0, %s110
    $region4: #{tpu_custom_call.1} parent=1 // loop_header_branch
      %21 = sbr.rel (%p19) target = $region8
    $region5: #{tpu_custom_call.1} parent=1 // loop_body
      %s23 = ssub.s32 %s18, 1
      %s24 = ssub.s32 %s18, 2
      %s25 = sadd.s32 %s18, 1
      %s26 = ssub.s32 %s18, %s25
      %p27 = scmp.eq.s32.totalorder %s26, 0
      %s29 = sadd.s32 %s28, 1
      %s30 = scalar_select %p27, %s28, %s29
      %p33 = pneg %p27
      %p34 = scmp.eq.s32.totalorder %s18, 1
      %p35 = por %p33, %p34
      %p36 = scmp.ne.s32.totalorder %s28, %s31
      %p37 = scmp.eq.s32.totalorder %s18, 0
      %p38 = por %p36, %p37
      %p39 = scmp.ne.s32.totalorder %s28, %s31
      %p40 = scmp.eq.s32.totalorder %s23, 1
      %p41 = por %p39, %p40
      %p42 = scmp.ne.s32.totalorder %s31, %s32
      %p43 = scmp.eq.s32.totalorder %s23, 0
      %p44 = por %p42, %p43
      %p45 = scmp.ne.s32.totalorder %s31, %s32
      %p46 = scmp.eq.s32.totalorder %s24, 1
      %p47 = por %p45, %p46
      %p49 = scmp.ne.s32.totalorder %s32, %s48
      %p50 = scmp.eq.s32.totalorder %s24, 0
      %p51 = por %p49, %p50
      %s52 = ssub.s32 %s18, %s25
      %p53 = scmp.eq.s32.totalorder %s52, 0
      %s55 = sadd.s32 %s54, 1
      %s56 = scalar_select %p53, %s54, %s55
      %p59 = pneg %p53
      %p60 = scmp.eq.s32.totalorder %s18, 1
      %p61 = por %p59, %p60
      %p62 = scmp.ne.s32.totalorder %s54, %s57
      %p63 = scmp.eq.s32.totalorder %s18, 0
      %p64 = por %p62, %p63
      %p65 = scmp.ne.s32.totalorder %s54, %s57
      %p66 = scmp.eq.s32.totalorder %s23, 1
      %p67 = por %p65, %p66
      %p68 = scmp.ne.s32.totalorder %s57, %s58
      %p69 = scmp.eq.s32.totalorder %s23, 0
      %p70 = por %p68, %p69
      %p71 = scmp.ne.s32.totalorder %s57, %s58
      %p72 = scmp.eq.s32.totalorder %s24, 1
      %p73 = por %p71, %p72
      %p75 = scmp.ne.s32.totalorder %s58, %s74
      %p76 = scmp.eq.s32.totalorder %s24, 0
      %p77 = por %p75, %p76
      %s78 = ssub.s32 %s18, %s25
      %p79 = scmp.eq.s32.totalorder %s78, 0
      %s81 = sadd.s32 %s80, 1
      %s82 = scalar_select %p79, %s80, %s81
      %p85 = pneg %p79
      %p86 = scmp.eq.s32.totalorder %s18, 1
      %p87 = por %p85, %p86
      %p88 = scmp.ne.s32.totalorder %s80, %s83
      %p89 = scmp.eq.s32.totalorder %s18, 0
      %p90 = por %p88, %p89
      %p91 = scmp.ne.s32.totalorder %s80, %s83
      %p92 = scmp.eq.s32.totalorder %s23, 1
      %p93 = por %p91, %p92
      %p94 = scmp.ne.s32.totalorder %s83, %s84
      %p95 = scmp.eq.s32.totalorder %s23, 0
      %p96 = por %p94, %p95
      %p97 = scmp.ne.s32.totalorder %s83, %s84
      %p98 = scmp.eq.s32.totalorder %s24, 1
      %p99 = por %p97, %p98
      %p101 = scmp.ne.s32.totalorder %s84, %s100
      %p102 = scmp.eq.s32.totalorder %s24, 0
      %p103 = por %p101, %p102
      %s104 = ssub.s32 %s18, %s25
      %p105 = scmp.eq.s32.totalorder %s104, 0
      %s107 = sadd.s32 %s106, 1
      %s108 = scalar_select %p105, %s106, %s107
      %p111 = pneg %p105
      %p112 = scmp.eq.s32.totalorder %s18, 1
      %p113 = por %p111, %p112
      %p114 = scmp.ne.s32.totalorder %s106, %s109
      %p115 = scmp.eq.s32.totalorder %s18, 0
      %p116 = por %p114, %p115
      %p117 = scmp.ne.s32.totalorder %s106, %s109
      %p118 = scmp.eq.s32.totalorder %s23, 1
      %p119 = por %p117, %p118
      %p120 = scmp.ne.s32.totalorder %s109, %s110
      %p121 = scmp.eq.s32.totalorder %s23, 0
      %p122 = por %p120, %p121
      %p123 = scmp.ne.s32.totalorder %s109, %s110
      %p124 = scmp.eq.s32.totalorder %s24, 1
      %p125 = por %p123, %p124
      %p127 = scmp.ne.s32.totalorder %s110, %s126
      %p128 = scmp.eq.s32.totalorder %s24, 0
      %p129 = por %p127, %p128
      %p130 = scmp.le.s32.totalorder 1, %s18
      %p131 = scmp.lt.s32.totalorder %s18, 3
      %p132 = pnand %p130, %p131
      %p133 = pneg %p132
      // Predicated region
      $region9: #{tpu_custom_call.1} parent=5 // pred_check
        _
      $region10: #{tpu_custom_call.1} parent=5 // pred_check_branch
        %135 = sbr.rel (%p132) target = $region12
      $region11: #{tpu_custom_call.1} parent=5 // pred_region
        %s136 = ssub.s32 %s18, 1
      $region12: #{tpu_custom_call.1} parent=5 // pred_fallthru
        _
      %p137 = scmp.lt.s32.totalorder %s18, 2
      // Predicated region
      $region13: #{tpu_custom_call.1} parent=5 // pred_check
        %p138 = pneg %p137
      $region14: #{tpu_custom_call.1} parent=5 // pred_check_branch
        %140 = sbr.rel (%p138) target = $region16
      $region15: #{tpu_custom_call.1} parent=5 // pred_region
        // Predicated region
        $region17: #{tpu_custom_call.1} parent=15 // pred_check
          %p141 = pneg %p38
        $region18: #{tpu_custom_call.1} parent=15 // pred_check_branch
          %143 = sbr.rel (%p141) target = $region20
        $region19: #{tpu_custom_call.1} parent=15 // pred_region
          %s144 = sand.u32 %s28, 1
          %s145 = scalar_lea.sflag [#allocation3], %s144
          %s146 = sand.u32 %s28, 1
          %s147 = smul.addr %s146, 2048
          %s148 = scalar_lea.vmem [#allocation2], %s147
          %s149 = smul.u32 256, %s18
          %s150 = ssub.s32 293, %s149
          %p151 = scmp.lt.s32.totalorder %s150, 256
          %s152 = scalar_select %p151, %s150, 256
          %s153 = smul.u32 8, %s152
          %s154 = ssub.s32 2048, %s153
          %s155 = sshll.u32 %s154, 4
          %156 = vsyncadd %s145, %s155
          %p157 = scmp.ne.s32.totalorder 0, %s153
          %s158 = smul.addr %s149, 8
          %s159 = scalar_lea.hbm %s0, %s158
          %s160 = smul.u32 8, %s152
          %s161 = sshll.u32 %s159, 4
          %s162 = int_to_ptr.hbm [resolvable:$true] %s161
          %s163 = sshll.u32 %s148, 4
          %s164 = int_to_ptr.vmem [resolvable:$true] %s163
          %s165 = sshll.u32 %s160, 4
          %169 = dma.hbm_to_vmem [thread:$0]  (%p157), %s162, %s165, %s164, %s145, 128, 128, 8
        $region20: #{tpu_custom_call.1} parent=15 // pred_fallthru
          _
        // Predicated region
        $region21: #{tpu_custom_call.1} parent=15 // pred_check
          %p170 = pneg %p64
        $region22: #{tpu_custom_call.1} parent=15 // pred_check_branch
          %172 = sbr.rel (%p170) target = $region24
        $region23: #{tpu_custom_call.1} parent=15 // pred_region
          %s173 = sand.u32 %s18, 1
          %s174 = scalar_lea.sflag [#allocation6], %s173
          %s175 = sand.u32 %s54, 1
          %s176 = smul.addr %s175, 2048
          %s177 = scalar_lea.vmem [#allocation5], %s176
          %s178 = smul.u32 256, %s18
          %s179 = ssub.s32 293, %s178
          %p180 = scmp.lt.s32.totalorder %s179, 256
          %s181 = scalar_select %p180, %s179, 256
          %s182 = smul.u32 8, %s181
          %s183 = ssub.s32 2048, %s182
          %s184 = sshll.u32 %s183, 4
          %185 = vsyncadd %s174, %s184
          %p186 = scmp.ne.s32.totalorder 0, %s182
          %s187 = smul.addr %s178, 8
          %s188 = scalar_lea.hbm %s1, %s187
          %s189 = smul.u32 8, %s181
          %s190 = sshll.u32 %s188, 4
          %s191 = int_to_ptr.hbm [resolvable:$true] %s190
          %s192 = sshll.u32 %s177, 4
          %s193 = int_to_ptr.vmem [resolvable:$true] %s192
          %s194 = sshll.u32 %s189, 4
          %198 = dma.hbm_to_vmem [thread:$0]  (%p186), %s191, %s194, %s193, %s174, 128, 128, 8
        $region24: #{tpu_custom_call.1} parent=15 // pred_fallthru
          _
        // Predicated region
        $region25: #{tpu_custom_call.1} parent=15 // pred_check
          %p199 = pneg %p90
        $region26: #{tpu_custom_call.1} parent=15 // pred_check_branch
          %201 = sbr.rel (%p199) target = $region28
        $region27: #{tpu_custom_call.1} parent=15 // pred_region
          %s202 = sand.u32 %s18, 1
          %s203 = scalar_lea.sflag [#allocation6], %s202
          %s204 = sand.u32 %s80, 1
          %s205 = smul.addr %s204, 2048
          %s206 = scalar_lea.vmem [#allocation7], %s205
          %s207 = smul.u32 256, %s18
          %s208 = ssub.s32 293, %s207
          %p209 = scmp.lt.s32.totalorder %s208, 256
          %s210 = scalar_select %p209, %s208, 256
          %s211 = smul.u32 8, %s210
          %s212 = ssub.s32 2048, %s211
          %s213 = sshll.u32 %s212, 4
          %214 = vsyncadd %s203, %s213
          %p215 = scmp.ne.s32.totalorder 0, %s211
          %s216 = smul.addr %s207, 8
          %s217 = scalar_lea.hbm %s2, %s216
          %s218 = smul.u32 8, %s210
          %s219 = sshll.u32 %s217, 4
          %s220 = int_to_ptr.hbm [resolvable:$true] %s219
          %s221 = sshll.u32 %s206, 4
          %s222 = int_to_ptr.vmem [resolvable:$true] %s221
          %s223 = sshll.u32 %s218, 4
          %227 = dma.hbm_to_vmem [thread:$0]  (%p215), %s220, %s223, %s222, %s203, 128, 128, 8
        $region28: #{tpu_custom_call.1} parent=15 // pred_fallthru
          _
      $region16: #{tpu_custom_call.1} parent=5 // pred_fallthru
        _
      %p228 = scmp.le.s32.totalorder 1, %s18
      %p229 = scmp.lt.s32.totalorder %s18, 3
      %p230 = pnand %p228, %p229
      %p231 = pneg %p230
      // Predicated region
      $region29: #{tpu_custom_call.1} parent=5 // pred_check
        _
      $region30: #{tpu_custom_call.1} parent=5 // pred_check_branch
        %233 = sbr.rel (%p230) target = $region32
      $region31: #{tpu_custom_call.1} parent=5 // pred_region
        %s234 = ssub.s32 %s18, 1
        %s235 = sand.u32 %s31, 1
        %s236 = scalar_lea.sflag [#allocation3], %s235
        %s237 = sand.u32 %s31, 1
        %s238 = smul.addr %s237, 2048
        %s239 = scalar_lea.vmem [#allocation2], %s238
        // Predicated region
        $region33: #{tpu_custom_call.1} parent=31 // pred_check
          %p240 = pneg %p44
        $region34: #{tpu_custom_call.1} parent=31 // pred_check_branch
          %242 = sbr.rel (%p240) target = $region36
        $region35: #{tpu_custom_call.1} parent=31 // pred_region
          %244 = dma.done %s236, 32768
        $region36: #{tpu_custom_call.1} parent=31 // pred_fallthru
          _
        %s245 = sand.u32 %s23, 1
        %s246 = scalar_lea.sflag [#allocation6], %s245
        %s247 = sand.u32 %s57, 1
        %s248 = smul.addr %s247, 2048
        %s249 = scalar_lea.vmem [#allocation5], %s248
        // Predicated region
        $region37: #{tpu_custom_call.1} parent=31 // pred_check
          %p250 = pneg %p70
        $region38: #{tpu_custom_call.1} parent=31 // pred_check_branch
          %252 = sbr.rel (%p250) target = $region40
        $region39: #{tpu_custom_call.1} parent=31 // pred_region
          %254 = dma.done %s246, 32768
        $region40: #{tpu_custom_call.1} parent=31 // pred_fallthru
          _
        %s255 = sand.u32 %s23, 1
        %s256 = scalar_lea.sflag [#allocation6], %s255
        %s257 = sand.u32 %s83, 1
        %s258 = smul.addr %s257, 2048
        %s259 = scalar_lea.vmem [#allocation7], %s258
        // Predicated region
        $region41: #{tpu_custom_call.1} parent=31 // pred_check
          %p260 = pneg %p96
        $region42: #{tpu_custom_call.1} parent=31 // pred_check_branch
          %262 = sbr.rel (%p260) target = $region44
        $region43: #{tpu_custom_call.1} parent=31 // pred_region
          %264 = dma.done %s256, 32768
        $region44: #{tpu_custom_call.1} parent=31 // pred_fallthru
          _
        %s265 = sand.u32 %s31, 1
        %s266 = scalar_lea.sflag [#allocation3], %s265
        %s267 = sand.u32 %s31, 1
        %s268 = smul.addr %s267, 2048
        %s269 = scalar_lea.vmem [#allocation2], %s268
        %p270 = pneg %p44
        %p271 = pneg %p41
        %s272 = sand.u32 %s23, 1
        %s273 = scalar_lea.sflag [#allocation6], %s272
        %s274 = sand.u32 %s57, 1
        %s275 = smul.addr %s274, 2048
        %s276 = scalar_lea.vmem [#allocation5], %s275
        %p277 = pneg %p70
        %p278 = pneg %p67
        %s279 = sand.u32 %s23, 1
        %s280 = scalar_lea.sflag [#allocation6], %s279
        %s281 = sand.u32 %s83, 1
        %s282 = smul.addr %s281, 2048
        %s283 = scalar_lea.vmem [#allocation7], %s282
        %p284 = pneg %p96
        %p285 = pneg %p93
        %p286 = pneg %p122
        %p287 = pneg %p119
        %s288 = sand.u32 %s109, 1
        %s289 = scalar_lea.sflag [#allocation4], %s288
        %s290 = sand.u32 %s109, 1
        %s291 = smul.addr %s290, 2048
        %s292 = scalar_lea.vmem [#allocation8], %s291
        %s293 = smul.u32 256, %s23
        %s294 = ssub.s32 293, %s293
        %p295 = scmp.lt.s32.totalorder %s294, 256
        %s296 = scalar_select %p295, %s294, 256
        %s297 = smul.u32 8, %s296
        %s298 = smul.u32 256, %s23
        %s299 = ssub.s32 293, %s298
        %p300 = scmp.lt.s32.totalorder %s299, 256
        %s301 = scalar_select %p300, %s299, 256
        %s302 = smul.u32 8, %s301
        %s303 = smul.u32 256, %s23
        %s304 = ssub.s32 293, %s303
        %p305 = scmp.lt.s32.totalorder %s304, 256
        %s306 = scalar_select %p305, %s304, 256
        %s307 = smul.u32 8, %s306
        %s308 = smul.u32 256, %s23
        %s309 = ssub.s32 293, %s308
        %p310 = scmp.lt.s32.totalorder %s309, 256
        %s311 = scalar_select %p310, %s309, 256
        %s312 = smul.u32 8, %s311
        %v313 = vld [vmem:[%s239] sm:$0xff]
        %v314 = vld [vmem:[%s239 + $0x8] sm:$0xff]
        %v315 = vld [vmem:[%s239 + $0x10] sm:$0xff]
        %v316 = vld [vmem:[%s239 + $0x18] sm:$0xff]
        %v317 = vld [vmem:[%s239 + $0x20] sm:$0xff]
        %v318 = vld [vmem:[%s239 + $0x28] sm:$0xff]
        %v319 = vld [vmem:[%s239 + $0x30] sm:$0xff]
        %v320 = vld [vmem:[%s239 + $0x38] sm:$0xff]
        %v321 = vld [vmem:[%s239 + $0x40] sm:$0xff]
        %v322 = vld [vmem:[%s239 + $0x48] sm:$0xff]
        %v323 = vld [vmem:[%s239 + $0x50] sm:$0xff]
        %v324 = vld [vmem:[%s239 + $0x58] sm:$0xff]
        %v325 = vld [vmem:[%s239 + $0x60] sm:$0xff]
        %v326 = vld [vmem:[%s239 + $0x68] sm:$0xff]
        %v327 = vld [vmem:[%s239 + $0x70] sm:$0xff]
        %v328 = vld [vmem:[%s239 + $0x78] sm:$0xff]
        %v329 = vld [vmem:[%s239 + $0x80] sm:$0xff]
        %v330 = vld [vmem:[%s239 + $0x88] sm:$0xff]
        %v331 = vld [vmem:[%s239 + $0x90] sm:$0xff]
        %v332 = vld [vmem:[%s239 + $0x98] sm:$0xff]
        %v333 = vld [vmem:[%s239 + $0xa0] sm:$0xff]
        %v334 = vld [vmem:[%s239 + $0xa8] sm:$0xff]
        %v335 = vld [vmem:[%s239 + $0xb0] sm:$0xff]
        %v336 = vld [vmem:[%s239 + $0xb8] sm:$0xff]
        %v337 = vld [vmem:[%s239 + $0xc0] sm:$0xff]
        %v338 = vld [vmem:[%s239 + $0xc8] sm:$0xff]
        %v339 = vld [vmem:[%s239 + $0xd0] sm:$0xff]
        %v340 = vld [vmem:[%s239 + $0xd8] sm:$0xff]
        %v341 = vld [vmem:[%s239 + $0xe0] sm:$0xff]
        %v342 = vld [vmem:[%s239 + $0xe8] sm:$0xff]
        %v343 = vld [vmem:[%s239 + $0xf0] sm:$0xff]
        %v344 = vld [vmem:[%s239 + $0xf8] sm:$0xff]
        %v345 = vld [vmem:[%s239 + $0x100] sm:$0xff]
        %v346 = vld [vmem:[%s239 + $0x108] sm:$0xff]
        %v347 = vld [vmem:[%s239 + $0x110] sm:$0xff]
        %v348 = vld [vmem:[%s239 + $0x118] sm:$0xff]
        %v349 = vld [vmem:[%s239 + $0x120] sm:$0xff]
        %v350 = vld [vmem:[%s239 + $0x128] sm:$0xff]
        %v351 = vld [vmem:[%s239 + $0x130] sm:$0xff]
        %v352 = vld [vmem:[%s239 + $0x138] sm:$0xff]
        %v353 = vld [vmem:[%s239 + $0x140] sm:$0xff]
        %v354 = vld [vmem:[%s239 + $0x148] sm:$0xff]
        %v355 = vld [vmem:[%s239 + $0x150] sm:$0xff]
        %v356 = vld [vmem:[%s239 + $0x158] sm:$0xff]
        %v357 = vld [vmem:[%s239 + $0x160] sm:$0xff]
        %v358 = vld [vmem:[%s239 + $0x168] sm:$0xff]
        %v359 = vld [vmem:[%s239 + $0x170] sm:$0xff]
        %v360 = vld [vmem:[%s239 + $0x178] sm:$0xff]
        %v361 = vld [vmem:[%s239 + $0x180] sm:$0xff]
        %v362 = vld [vmem:[%s239 + $0x188] sm:$0xff]
        %v363 = vld [vmem:[%s239 + $0x190] sm:$0xff]
        %v364 = vld [vmem:[%s239 + $0x198] sm:$0xff]
        %v365 = vld [vmem:[%s239 + $0x1a0] sm:$0xff]
        %v366 = vld [vmem:[%s239 + $0x1a8] sm:$0xff]
        %v367 = vld [vmem:[%s239 + $0x1b0] sm:$0xff]
        %v368 = vld [vmem:[%s239 + $0x1b8] sm:$0xff]
        %v369 = vld [vmem:[%s239 + $0x1c0] sm:$0xff]
        %v370 = vld [vmem:[%s239 + $0x1c8] sm:$0xff]
        %v371 = vld [vmem:[%s239 + $0x1d0] sm:$0xff]
        %v372 = vld [vmem:[%s239 + $0x1d8] sm:$0xff]
        %v373 = vld [vmem:[%s239 + $0x1e0] sm:$0xff]
        %v374 = vld [vmem:[%s239 + $0x1e8] sm:$0xff]
        %v375 = vld [vmem:[%s239 + $0x1f0] sm:$0xff]
        %v376 = vld [vmem:[%s239 + $0x1f8] sm:$0xff]
        %v377 = vld [vmem:[%s239 + $0x200] sm:$0xff]
        %v378 = vld [vmem:[%s239 + $0x208] sm:$0xff]
        %v379 = vld [vmem:[%s239 + $0x210] sm:$0xff]
        %v380 = vld [vmem:[%s239 + $0x218] sm:$0xff]
        %v381 = vld [vmem:[%s239 + $0x220] sm:$0xff]
        %v382 = vld [vmem:[%s239 + $0x228] sm:$0xff]
        %v383 = vld [vmem:[%s239 + $0x230] sm:$0xff]
        %v384 = vld [vmem:[%s239 + $0x238] sm:$0xff]
        %v385 = vld [vmem:[%s239 + $0x240] sm:$0xff]
        %v386 = vld [vmem:[%s239 + $0x248] sm:$0xff]
        %v387 = vld [vmem:[%s239 + $0x250] sm:$0xff]
        %v388 = vld [vmem:[%s239 + $0x258] sm:$0xff]
        %v389 = vld [vmem:[%s239 + $0x260] sm:$0xff]
        %v390 = vld [vmem:[%s239 + $0x268] sm:$0xff]
        %v391 = vld [vmem:[%s239 + $0x270] sm:$0xff]
        %v392 = vld [vmem:[%s239 + $0x278] sm:$0xff]
        %v393 = vld [vmem:[%s239 + $0x280] sm:$0xff]
        %v394 = vld [vmem:[%s239 + $0x288] sm:$0xff]
        %v395 = vld [vmem:[%s239 + $0x290] sm:$0xff]
        %v396 = vld [vmem:[%s239 + $0x298] sm:$0xff]
        %v397 = vld [vmem:[%s239 + $0x2a0] sm:$0xff]
        %v398 = vld [vmem:[%s239 + $0x2a8] sm:$0xff]
        %v399 = vld [vmem:[%s239 + $0x2b0] sm:$0xff]
        %v400 = vld [vmem:[%s239 + $0x2b8] sm:$0xff]
        %v401 = vld [vmem:[%s239 + $0x2c0] sm:$0xff]
        %v402 = vld [vmem:[%s239 + $0x2c8] sm:$0xff]
        %v403 = vld [vmem:[%s239 + $0x2d0] sm:$0xff]
        %v404 = vld [vmem:[%s239 + $0x2d8] sm:$0xff]
        %v405 = vld [vmem:[%s239 + $0x2e0] sm:$0xff]
        %v406 = vld [vmem:[%s239 + $0x2e8] sm:$0xff]
        %v407 = vld [vmem:[%s239 + $0x2f0] sm:$0xff]
        %v408 = vld [vmem:[%s239 + $0x2f8] sm:$0xff]
        %v409 = vld [vmem:[%s239 + $0x300] sm:$0xff]
        %v410 = vld [vmem:[%s239 + $0x308] sm:$0xff]
        %v411 = vld [vmem:[%s239 + $0x310] sm:$0xff]
        %v412 = vld [vmem:[%s239 + $0x318] sm:$0xff]
        %v413 = vld [vmem:[%s239 + $0x320] sm:$0xff]
        %v414 = vld [vmem:[%s239 + $0x328] sm:$0xff]
        %v415 = vld [vmem:[%s239 + $0x330] sm:$0xff]
        %v416 = vld [vmem:[%s239 + $0x338] sm:$0xff]
        %v417 = vld [vmem:[%s239 + $0x340] sm:$0xff]
        %v418 = vld [vmem:[%s239 + $0x348] sm:$0xff]
        %v419 = vld [vmem:[%s239 + $0x350] sm:$0xff]
        %v420 = vld [vmem:[%s239 + $0x358] sm:$0xff]
        %v421 = vld [vmem:[%s239 + $0x360] sm:$0xff]
        %v422 = vld [vmem:[%s239 + $0x368] sm:$0xff]
        %v423 = vld [vmem:[%s239 + $0x370] sm:$0xff]
        %v424 = vld [vmem:[%s239 + $0x378] sm:$0xff]
        %v425 = vld [vmem:[%s239 + $0x380] sm:$0xff]
        %v426 = vld [vmem:[%s239 + $0x388] sm:$0xff]
        %v427 = vld [vmem:[%s239 + $0x390] sm:$0xff]
        %v428 = vld [vmem:[%s239 + $0x398] sm:$0xff]
        %v429 = vld [vmem:[%s239 + $0x3a0] sm:$0xff]
        %v430 = vld [vmem:[%s239 + $0x3a8] sm:$0xff]
        %v431 = vld [vmem:[%s239 + $0x3b0] sm:$0xff]
        %v432 = vld [vmem:[%s239 + $0x3b8] sm:$0xff]
        %v433 = vld [vmem:[%s239 + $0x3c0] sm:$0xff]
        %v434 = vld [vmem:[%s239 + $0x3c8] sm:$0xff]
        %v435 = vld [vmem:[%s239 + $0x3d0] sm:$0xff]
        %v436 = vld [vmem:[%s239 + $0x3d8] sm:$0xff]
        %v437 = vld [vmem:[%s239 + $0x3e0] sm:$0xff]
        %v438 = vld [vmem:[%s239 + $0x3e8] sm:$0xff]
        %v439 = vld [vmem:[%s239 + $0x3f0] sm:$0xff]
        %v440 = vld [vmem:[%s239 + $0x3f8] sm:$0xff]
        %v441 = vld [vmem:[%s239 + $0x400] sm:$0xff]
        %v442 = vld [vmem:[%s239 + $0x408] sm:$0xff]
        %v443 = vld [vmem:[%s239 + $0x410] sm:$0xff]
        %v444 = vld [vmem:[%s239 + $0x418] sm:$0xff]
        %v445 = vld [vmem:[%s239 + $0x420] sm:$0xff]
        %v446 = vld [vmem:[%s239 + $0x428] sm:$0xff]
        %v447 = vld [vmem:[%s239 + $0x430] sm:$0xff]
        %v448 = vld [vmem:[%s239 + $0x438] sm:$0xff]
        %v449 = vld [vmem:[%s239 + $0x440] sm:$0xff]
        %v450 = vld [vmem:[%s239 + $0x448] sm:$0xff]
        %v451 = vld [vmem:[%s239 + $0x450] sm:$0xff]
        %v452 = vld [vmem:[%s239 + $0x458] sm:$0xff]
        %v453 = vld [vmem:[%s239 + $0x460] sm:$0xff]
        %v454 = vld [vmem:[%s239 + $0x468] sm:$0xff]
        %v455 = vld [vmem:[%s239 + $0x470] sm:$0xff]
        %v456 = vld [vmem:[%s239 + $0x478] sm:$0xff]
        %v457 = vld [vmem:[%s239 + $0x480] sm:$0xff]
        %v458 = vld [vmem:[%s239 + $0x488] sm:$0xff]
        %v459 = vld [vmem:[%s239 + $0x490] sm:$0xff]
        %v460 = vld [vmem:[%s239 + $0x498] sm:$0xff]
        %v461 = vld [vmem:[%s239 + $0x4a0] sm:$0xff]
        %v462 = vld [vmem:[%s239 + $0x4a8] sm:$0xff]
        %v463 = vld [vmem:[%s239 + $0x4b0] sm:$0xff]
        %v464 = vld [vmem:[%s239 + $0x4b8] sm:$0xff]
        %v465 = vld [vmem:[%s239 + $0x4c0] sm:$0xff]
        %v466 = vld [vmem:[%s239 + $0x4c8] sm:$0xff]
        %v467 = vld [vmem:[%s239 + $0x4d0] sm:$0xff]
        %v468 = vld [vmem:[%s239 + $0x4d8] sm:$0xff]
        %v469 = vld [vmem:[%s239 + $0x4e0] sm:$0xff]
        %v470 = vld [vmem:[%s239 + $0x4e8] sm:$0xff]
        %v471 = vld [vmem:[%s239 + $0x4f0] sm:$0xff]
        %v472 = vld [vmem:[%s239 + $0x4f8] sm:$0xff]
        %v473 = vld [vmem:[%s239 + $0x500] sm:$0xff]
        %v474 = vld [vmem:[%s239 + $0x508] sm:$0xff]
        %v475 = vld [vmem:[%s239 + $0x510] sm:$0xff]
        %v476 = vld [vmem:[%s239 + $0x518] sm:$0xff]
        %v477 = vld [vmem:[%s239 + $0x520] sm:$0xff]
        %v478 = vld [vmem:[%s239 + $0x528] sm:$0xff]
        %v479 = vld [vmem:[%s239 + $0x530] sm:$0xff]
        %v480 = vld [vmem:[%s239 + $0x538] sm:$0xff]
        %v481 = vld [vmem:[%s239 + $0x540] sm:$0xff]
        %v482 = vld [vmem:[%s239 + $0x548] sm:$0xff]
        %v483 = vld [vmem:[%s239 + $0x550] sm:$0xff]
        %v484 = vld [vmem:[%s239 + $0x558] sm:$0xff]
        %v485 = vld [vmem:[%s239 + $0x560] sm:$0xff]
        %v486 = vld [vmem:[%s239 + $0x568] sm:$0xff]
        %v487 = vld [vmem:[%s239 + $0x570] sm:$0xff]
        %v488 = vld [vmem:[%s239 + $0x578] sm:$0xff]
        %v489 = vld [vmem:[%s239 + $0x580] sm:$0xff]
        %v490 = vld [vmem:[%s239 + $0x588] sm:$0xff]
        %v491 = vld [vmem:[%s239 + $0x590] sm:$0xff]
        %v492 = vld [vmem:[%s239 + $0x598] sm:$0xff]
        %v493 = vld [vmem:[%s239 + $0x5a0] sm:$0xff]
        %v494 = vld [vmem:[%s239 + $0x5a8] sm:$0xff]
        %v495 = vld [vmem:[%s239 + $0x5b0] sm:$0xff]
        %v496 = vld [vmem:[%s239 + $0x5b8] sm:$0xff]
        %v497 = vld [vmem:[%s239 + $0x5c0] sm:$0xff]
        %v498 = vld [vmem:[%s239 + $0x5c8] sm:$0xff]
        %v499 = vld [vmem:[%s239 + $0x5d0] sm:$0xff]
        %v500 = vld [vmem:[%s239 + $0x5d8] sm:$0xff]
        %v501 = vld [vmem:[%s239 + $0x5e0] sm:$0xff]
        %v502 = vld [vmem:[%s239 + $0x5e8] sm:$0xff]
        %v503 = vld [vmem:[%s239 + $0x5f0] sm:$0xff]
        %v504 = vld [vmem:[%s239 + $0x5f8] sm:$0xff]
        %v505 = vld [vmem:[%s239 + $0x600] sm:$0xff]
        %v506 = vld [vmem:[%s239 + $0x608] sm:$0xff]
        %v507 = vld [vmem:[%s239 + $0x610] sm:$0xff]
        %v508 = vld [vmem:[%s239 + $0x618] sm:$0xff]
        %v509 = vld [vmem:[%s239 + $0x620] sm:$0xff]
        %v510 = vld [vmem:[%s239 + $0x628] sm:$0xff]
        %v511 = vld [vmem:[%s239 + $0x630] sm:$0xff]
        %v512 = vld [vmem:[%s239 + $0x638] sm:$0xff]
        %v513 = vld [vmem:[%s239 + $0x640] sm:$0xff]
        %v514 = vld [vmem:[%s239 + $0x648] sm:$0xff]
        %v515 = vld [vmem:[%s239 + $0x650] sm:$0xff]
        %v516 = vld [vmem:[%s239 + $0x658] sm:$0xff]
        %v517 = vld [vmem:[%s239 + $0x660] sm:$0xff]
        %v518 = vld [vmem:[%s239 + $0x668] sm:$0xff]
        %v519 = vld [vmem:[%s239 + $0x670] sm:$0xff]
        %v520 = vld [vmem:[%s239 + $0x678] sm:$0xff]
        %v521 = vld [vmem:[%s239 + $0x680] sm:$0xff]
        %v522 = vld [vmem:[%s239 + $0x688] sm:$0xff]
        %v523 = vld [vmem:[%s239 + $0x690] sm:$0xff]
        %v524 = vld [vmem:[%s239 + $0x698] sm:$0xff]
        %v525 = vld [vmem:[%s239 + $0x6a0] sm:$0xff]
        %v526 = vld [vmem:[%s239 + $0x6a8] sm:$0xff]
        %v527 = vld [vmem:[%s239 + $0x6b0] sm:$0xff]
        %v528 = vld [vmem:[%s239 + $0x6b8] sm:$0xff]
        %v529 = vld [vmem:[%s239 + $0x6c0] sm:$0xff]
        %v530 = vld [vmem:[%s239 + $0x6c8] sm:$0xff]
        %v531 = vld [vmem:[%s239 + $0x6d0] sm:$0xff]
        %v532 = vld [vmem:[%s239 + $0x6d8] sm:$0xff]
        %v533 = vld [vmem:[%s239 + $0x6e0] sm:$0xff]
        %v534 = vld [vmem:[%s239 + $0x6e8] sm:$0xff]
        %v535 = vld [vmem:[%s239 + $0x6f0] sm:$0xff]
        %v536 = vld [vmem:[%s239 + $0x6f8] sm:$0xff]
        %v537 = vld [vmem:[%s239 + $0x700] sm:$0xff]
        %v538 = vld [vmem:[%s239 + $0x708] sm:$0xff]
        %v539 = vld [vmem:[%s239 + $0x710] sm:$0xff]
        %v540 = vld [vmem:[%s239 + $0x718] sm:$0xff]
        %v541 = vld [vmem:[%s239 + $0x720] sm:$0xff]
        %v542 = vld [vmem:[%s239 + $0x728] sm:$0xff]
        %v543 = vld [vmem:[%s239 + $0x730] sm:$0xff]
        %v544 = vld [vmem:[%s239 + $0x738] sm:$0xff]
        %v545 = vld [vmem:[%s239 + $0x740] sm:$0xff]
        %v546 = vld [vmem:[%s239 + $0x748] sm:$0xff]
        %v547 = vld [vmem:[%s239 + $0x750] sm:$0xff]
        %v548 = vld [vmem:[%s239 + $0x758] sm:$0xff]
        %v549 = vld [vmem:[%s239 + $0x760] sm:$0xff]
        %v550 = vld [vmem:[%s239 + $0x768] sm:$0xff]
        %v551 = vld [vmem:[%s239 + $0x770] sm:$0xff]
        %v552 = vld [vmem:[%s239 + $0x778] sm:$0xff]
        %v553 = vld [vmem:[%s239 + $0x780] sm:$0xff]
        %v554 = vld [vmem:[%s239 + $0x788] sm:$0xff]
        %v555 = vld [vmem:[%s239 + $0x790] sm:$0xff]
        %v556 = vld [vmem:[%s239 + $0x798] sm:$0xff]
        %v557 = vld [vmem:[%s239 + $0x7a0] sm:$0xff]
        %v558 = vld [vmem:[%s239 + $0x7a8] sm:$0xff]
        %v559 = vld [vmem:[%s239 + $0x7b0] sm:$0xff]
        %v560 = vld [vmem:[%s239 + $0x7b8] sm:$0xff]
        %v561 = vld [vmem:[%s239 + $0x7c0] sm:$0xff]
        %v562 = vld [vmem:[%s239 + $0x7c8] sm:$0xff]
        %v563 = vld [vmem:[%s239 + $0x7d0] sm:$0xff]
        %v564 = vld [vmem:[%s239 + $0x7d8] sm:$0xff]
        %v565 = vld [vmem:[%s239 + $0x7e0] sm:$0xff]
        %v566 = vld [vmem:[%s239 + $0x7e8] sm:$0xff]
        %v567 = vld [vmem:[%s239 + $0x7f0] sm:$0xff]
        %v568 = vld [vmem:[%s239 + $0x7f8] sm:$0xff]
        %v569 = vld [vmem:[%s249] sm:$0xff]
        %v570 = vld [vmem:[%s249 + $0x8] sm:$0xff]
        %v571 = vld [vmem:[%s249 + $0x10] sm:$0xff]
        %v572 = vld [vmem:[%s249 + $0x18] sm:$0xff]
        %v573 = vld [vmem:[%s249 + $0x20] sm:$0xff]
        %v574 = vld [vmem:[%s249 + $0x28] sm:$0xff]
        %v575 = vld [vmem:[%s249 + $0x30] sm:$0xff]
        %v576 = vld [vmem:[%s249 + $0x38] sm:$0xff]
        %v577 = vld [vmem:[%s249 + $0x40] sm:$0xff]
        %v578 = vld [vmem:[%s249 + $0x48] sm:$0xff]
        %v579 = vld [vmem:[%s249 + $0x50] sm:$0xff]
        %v580 = vld [vmem:[%s249 + $0x58] sm:$0xff]
        %v581 = vld [vmem:[%s249 + $0x60] sm:$0xff]
        %v582 = vld [vmem:[%s249 + $0x68] sm:$0xff]
        %v583 = vld [vmem:[%s249 + $0x70] sm:$0xff]
        %v584 = vld [vmem:[%s249 + $0x78] sm:$0xff]
        %v585 = vld [vmem:[%s249 + $0x80] sm:$0xff]
        %v586 = vld [vmem:[%s249 + $0x88] sm:$0xff]
        %v587 = vld [vmem:[%s249 + $0x90] sm:$0xff]
        %v588 = vld [vmem:[%s249 + $0x98] sm:$0xff]
        %v589 = vld [vmem:[%s249 + $0xa0] sm:$0xff]
        %v590 = vld [vmem:[%s249 + $0xa8] sm:$0xff]
        %v591 = vld [vmem:[%s249 + $0xb0] sm:$0xff]
        %v592 = vld [vmem:[%s249 + $0xb8] sm:$0xff]
        %v593 = vld [vmem:[%s249 + $0xc0] sm:$0xff]
        %v594 = vld [vmem:[%s249 + $0xc8] sm:$0xff]
        %v595 = vld [vmem:[%s249 + $0xd0] sm:$0xff]
        %v596 = vld [vmem:[%s249 + $0xd8] sm:$0xff]
        %v597 = vld [vmem:[%s249 + $0xe0] sm:$0xff]
        %v598 = vld [vmem:[%s249 + $0xe8] sm:$0xff]
        %v599 = vld [vmem:[%s249 + $0xf0] sm:$0xff]
        %v600 = vld [vmem:[%s249 + $0xf8] sm:$0xff]
        %v601 = vld [vmem:[%s249 + $0x100] sm:$0xff]
        %v602 = vld [vmem:[%s249 + $0x108] sm:$0xff]
        %v603 = vld [vmem:[%s249 + $0x110] sm:$0xff]
        %v604 = vld [vmem:[%s249 + $0x118] sm:$0xff]
        %v605 = vld [vmem:[%s249 + $0x120] sm:$0xff]
        %v606 = vld [vmem:[%s249 + $0x128] sm:$0xff]
        %v607 = vld [vmem:[%s249 + $0x130] sm:$0xff]
        %v608 = vld [vmem:[%s249 + $0x138] sm:$0xff]
        %v609 = vld [vmem:[%s249 + $0x140] sm:$0xff]
        %v610 = vld [vmem:[%s249 + $0x148] sm:$0xff]
        %v611 = vld [vmem:[%s249 + $0x150] sm:$0xff]
        %v612 = vld [vmem:[%s249 + $0x158] sm:$0xff]
        %v613 = vld [vmem:[%s249 + $0x160] sm:$0xff]
        %v614 = vld [vmem:[%s249 + $0x168] sm:$0xff]
        %v615 = vld [vmem:[%s249 + $0x170] sm:$0xff]
        %v616 = vld [vmem:[%s249 + $0x178] sm:$0xff]
        %v617 = vld [vmem:[%s249 + $0x180] sm:$0xff]
        %v618 = vld [vmem:[%s249 + $0x188] sm:$0xff]
        %v619 = vld [vmem:[%s249 + $0x190] sm:$0xff]
        %v620 = vld [vmem:[%s249 + $0x198] sm:$0xff]
        %v621 = vld [vmem:[%s249 + $0x1a0] sm:$0xff]
        %v622 = vld [vmem:[%s249 + $0x1a8] sm:$0xff]
        %v623 = vld [vmem:[%s249 + $0x1b0] sm:$0xff]
        %v624 = vld [vmem:[%s249 + $0x1b8] sm:$0xff]
        %v625 = vld [vmem:[%s249 + $0x1c0] sm:$0xff]
        %v626 = vld [vmem:[%s249 + $0x1c8] sm:$0xff]
        %v627 = vld [vmem:[%s249 + $0x1d0] sm:$0xff]
        %v628 = vld [vmem:[%s249 + $0x1d8] sm:$0xff]
        %v629 = vld [vmem:[%s249 + $0x1e0] sm:$0xff]
        %v630 = vld [vmem:[%s249 + $0x1e8] sm:$0xff]
        %v631 = vld [vmem:[%s249 + $0x1f0] sm:$0xff]
        %v632 = vld [vmem:[%s249 + $0x1f8] sm:$0xff]
        %v633 = vld [vmem:[%s249 + $0x200] sm:$0xff]
        %v634 = vld [vmem:[%s249 + $0x208] sm:$0xff]
        %v635 = vld [vmem:[%s249 + $0x210] sm:$0xff]
        %v636 = vld [vmem:[%s249 + $0x218] sm:$0xff]
        %v637 = vld [vmem:[%s249 + $0x220] sm:$0xff]
        %v638 = vld [vmem:[%s249 + $0x228] sm:$0xff]
        %v639 = vld [vmem:[%s249 + $0x230] sm:$0xff]
        %v640 = vld [vmem:[%s249 + $0x238] sm:$0xff]
        %v641 = vld [vmem:[%s249 + $0x240] sm:$0xff]
        %v642 = vld [vmem:[%s249 + $0x248] sm:$0xff]
        %v643 = vld [vmem:[%s249 + $0x250] sm:$0xff]
        %v644 = vld [vmem:[%s249 + $0x258] sm:$0xff]
        %v645 = vld [vmem:[%s249 + $0x260] sm:$0xff]
        %v646 = vld [vmem:[%s249 + $0x268] sm:$0xff]
        %v647 = vld [vmem:[%s249 + $0x270] sm:$0xff]
        %v648 = vld [vmem:[%s249 + $0x278] sm:$0xff]
        %v649 = vld [vmem:[%s249 + $0x280] sm:$0xff]
        %v650 = vld [vmem:[%s249 + $0x288] sm:$0xff]
        %v651 = vld [vmem:[%s249 + $0x290] sm:$0xff]
        %v652 = vld [vmem:[%s249 + $0x298] sm:$0xff]
        %v653 = vld [vmem:[%s249 + $0x2a0] sm:$0xff]
        %v654 = vld [vmem:[%s249 + $0x2a8] sm:$0xff]
        %v655 = vld [vmem:[%s249 + $0x2b0] sm:$0xff]
        %v656 = vld [vmem:[%s249 + $0x2b8] sm:$0xff]
        %v657 = vld [vmem:[%s249 + $0x2c0] sm:$0xff]
        %v658 = vld [vmem:[%s249 + $0x2c8] sm:$0xff]
        %v659 = vld [vmem:[%s249 + $0x2d0] sm:$0xff]
        %v660 = vld [vmem:[%s249 + $0x2d8] sm:$0xff]
        %v661 = vld [vmem:[%s249 + $0x2e0] sm:$0xff]
        %v662 = vld [vmem:[%s249 + $0x2e8] sm:$0xff]
        %v663 = vld [vmem:[%s249 + $0x2f0] sm:$0xff]
        %v664 = vld [vmem:[%s249 + $0x2f8] sm:$0xff]
        %v665 = vld [vmem:[%s249 + $0x300] sm:$0xff]
        %v666 = vld [vmem:[%s249 + $0x308] sm:$0xff]
        %v667 = vld [vmem:[%s249 + $0x310] sm:$0xff]
        %v668 = vld [vmem:[%s249 + $0x318] sm:$0xff]
        %v669 = vld [vmem:[%s249 + $0x320] sm:$0xff]
        %v670 = vld [vmem:[%s249 + $0x328] sm:$0xff]
        %v671 = vld [vmem:[%s249 + $0x330] sm:$0xff]
        %v672 = vld [vmem:[%s249 + $0x338] sm:$0xff]
        %v673 = vld [vmem:[%s249 + $0x340] sm:$0xff]
        %v674 = vld [vmem:[%s249 + $0x348] sm:$0xff]
        %v675 = vld [vmem:[%s249 + $0x350] sm:$0xff]
        %v676 = vld [vmem:[%s249 + $0x358] sm:$0xff]
        %v677 = vld [vmem:[%s249 + $0x360] sm:$0xff]
        %v678 = vld [vmem:[%s249 + $0x368] sm:$0xff]
        %v679 = vld [vmem:[%s249 + $0x370] sm:$0xff]
        %v680 = vld [vmem:[%s249 + $0x378] sm:$0xff]
        %v681 = vld [vmem:[%s249 + $0x380] sm:$0xff]
        %v682 = vld [vmem:[%s249 + $0x388] sm:$0xff]
        %v683 = vld [vmem:[%s249 + $0x390] sm:$0xff]
        %v684 = vld [vmem:[%s249 + $0x398] sm:$0xff]
        %v685 = vld [vmem:[%s249 + $0x3a0] sm:$0xff]
        %v686 = vld [vmem:[%s249 + $0x3a8] sm:$0xff]
        %v687 = vld [vmem:[%s249 + $0x3b0] sm:$0xff]
        %v688 = vld [vmem:[%s249 + $0x3b8] sm:$0xff]
        %v689 = vld [vmem:[%s249 + $0x3c0] sm:$0xff]
        %v690 = vld [vmem:[%s249 + $0x3c8] sm:$0xff]
        %v691 = vld [vmem:[%s249 + $0x3d0] sm:$0xff]
        %v692 = vld [vmem:[%s249 + $0x3d8] sm:$0xff]
        %v693 = vld [vmem:[%s249 + $0x3e0] sm:$0xff]
        %v694 = vld [vmem:[%s249 + $0x3e8] sm:$0xff]
        %v695 = vld [vmem:[%s249 + $0x3f0] sm:$0xff]
        %v696 = vld [vmem:[%s249 + $0x3f8] sm:$0xff]
        %v697 = vld [vmem:[%s249 + $0x400] sm:$0xff]
        %v698 = vld [vmem:[%s249 + $0x408] sm:$0xff]
        %v699 = vld [vmem:[%s249 + $0x410] sm:$0xff]
        %v700 = vld [vmem:[%s249 + $0x418] sm:$0xff]
        %v701 = vld [vmem:[%s249 + $0x420] sm:$0xff]
        %v702 = vld [vmem:[%s249 + $0x428] sm:$0xff]
        %v703 = vld [vmem:[%s249 + $0x430] sm:$0xff]
        %v704 = vld [vmem:[%s249 + $0x438] sm:$0xff]
        %v705 = vld [vmem:[%s249 + $0x440] sm:$0xff]
        %v706 = vld [vmem:[%s249 + $0x448] sm:$0xff]
        %v707 = vld [vmem:[%s249 + $0x450] sm:$0xff]
        %v708 = vld [vmem:[%s249 + $0x458] sm:$0xff]
        %v709 = vld [vmem:[%s249 + $0x460] sm:$0xff]
        %v710 = vld [vmem:[%s249 + $0x468] sm:$0xff]
        %v711 = vld [vmem:[%s249 + $0x470] sm:$0xff]
        %v712 = vld [vmem:[%s249 + $0x478] sm:$0xff]
        %v713 = vld [vmem:[%s249 + $0x480] sm:$0xff]
        %v714 = vld [vmem:[%s249 + $0x488] sm:$0xff]
        %v715 = vld [vmem:[%s249 + $0x490] sm:$0xff]
        %v716 = vld [vmem:[%s249 + $0x498] sm:$0xff]
        %v717 = vld [vmem:[%s249 + $0x4a0] sm:$0xff]
        %v718 = vld [vmem:[%s249 + $0x4a8] sm:$0xff]
        %v719 = vld [vmem:[%s249 + $0x4b0] sm:$0xff]
        %v720 = vld [vmem:[%s249 + $0x4b8] sm:$0xff]
        %v721 = vld [vmem:[%s249 + $0x4c0] sm:$0xff]
        %v722 = vld [vmem:[%s249 + $0x4c8] sm:$0xff]
        %v723 = vld [vmem:[%s249 + $0x4d0] sm:$0xff]
        %v724 = vld [vmem:[%s249 + $0x4d8] sm:$0xff]
        %v725 = vld [vmem:[%s249 + $0x4e0] sm:$0xff]
        %v726 = vld [vmem:[%s249 + $0x4e8] sm:$0xff]
        %v727 = vld [vmem:[%s249 + $0x4f0] sm:$0xff]
        %v728 = vld [vmem:[%s249 + $0x4f8] sm:$0xff]
        %v729 = vld [vmem:[%s249 + $0x500] sm:$0xff]
        %v730 = vld [vmem:[%s249 + $0x508] sm:$0xff]
        %v731 = vld [vmem:[%s249 + $0x510] sm:$0xff]
        %v732 = vld [vmem:[%s249 + $0x518] sm:$0xff]
        %v733 = vld [vmem:[%s249 + $0x520] sm:$0xff]
        %v734 = vld [vmem:[%s249 + $0x528] sm:$0xff]
        %v735 = vld [vmem:[%s249 + $0x530] sm:$0xff]
        %v736 = vld [vmem:[%s249 + $0x538] sm:$0xff]
        %v737 = vld [vmem:[%s249 + $0x540] sm:$0xff]
        %v738 = vld [vmem:[%s249 + $0x548] sm:$0xff]
        %v739 = vld [vmem:[%s249 + $0x550] sm:$0xff]
        %v740 = vld [vmem:[%s249 + $0x558] sm:$0xff]
        %v741 = vld [vmem:[%s249 + $0x560] sm:$0xff]
        %v742 = vld [vmem:[%s249 + $0x568] sm:$0xff]
        %v743 = vld [vmem:[%s249 + $0x570] sm:$0xff]
        %v744 = vld [vmem:[%s249 + $0x578] sm:$0xff]
        %v745 = vld [vmem:[%s249 + $0x580] sm:$0xff]
        %v746 = vld [vmem:[%s249 + $0x588] sm:$0xff]
        %v747 = vld [vmem:[%s249 + $0x590] sm:$0xff]
        %v748 = vld [vmem:[%s249 + $0x598] sm:$0xff]
        %v749 = vld [vmem:[%s249 + $0x5a0] sm:$0xff]
        %v750 = vld [vmem:[%s249 + $0x5a8] sm:$0xff]
        %v751 = vld [vmem:[%s249 + $0x5b0] sm:$0xff]
        %v752 = vld [vmem:[%s249 + $0x5b8] sm:$0xff]
        %v753 = vld [vmem:[%s249 + $0x5c0] sm:$0xff]
        %v754 = vld [vmem:[%s249 + $0x5c8] sm:$0xff]
        %v755 = vld [vmem:[%s249 + $0x5d0] sm:$0xff]
        %v756 = vld [vmem:[%s249 + $0x5d8] sm:$0xff]
        %v757 = vld [vmem:[%s249 + $0x5e0] sm:$0xff]
        %v758 = vld [vmem:[%s249 + $0x5e8] sm:$0xff]
        %v759 = vld [vmem:[%s249 + $0x5f0] sm:$0xff]
        %v760 = vld [vmem:[%s249 + $0x5f8] sm:$0xff]
        %v761 = vld [vmem:[%s249 + $0x600] sm:$0xff]
        %v762 = vld [vmem:[%s249 + $0x608] sm:$0xff]
        %v763 = vld [vmem:[%s249 + $0x610] sm:$0xff]
        %v764 = vld [vmem:[%s249 + $0x618] sm:$0xff]
        %v765 = vld [vmem:[%s249 + $0x620] sm:$0xff]
        %v766 = vld [vmem:[%s249 + $0x628] sm:$0xff]
        %v767 = vld [vmem:[%s249 + $0x630] sm:$0xff]
        %v768 = vld [vmem:[%s249 + $0x638] sm:$0xff]
        %v769 = vld [vmem:[%s249 + $0x640] sm:$0xff]
        %v770 = vld [vmem:[%s249 + $0x648] sm:$0xff]
        %v771 = vld [vmem:[%s249 + $0x650] sm:$0xff]
        %v772 = vld [vmem:[%s249 + $0x658] sm:$0xff]
        %v773 = vld [vmem:[%s249 + $0x660] sm:$0xff]
        %v774 = vld [vmem:[%s249 + $0x668] sm:$0xff]
        %v775 = vld [vmem:[%s249 + $0x670] sm:$0xff]
        %v776 = vld [vmem:[%s249 + $0x678] sm:$0xff]
        %v777 = vld [vmem:[%s249 + $0x680] sm:$0xff]
        %v778 = vld [vmem:[%s249 + $0x688] sm:$0xff]
        %v779 = vld [vmem:[%s249 + $0x690] sm:$0xff]
        %v780 = vld [vmem:[%s249 + $0x698] sm:$0xff]
        %v781 = vld [vmem:[%s249 + $0x6a0] sm:$0xff]
        %v782 = vld [vmem:[%s249 + $0x6a8] sm:$0xff]
        %v783 = vld [vmem:[%s249 + $0x6b0] sm:$0xff]
        %v784 = vld [vmem:[%s249 + $0x6b8] sm:$0xff]
        %v785 = vld [vmem:[%s249 + $0x6c0] sm:$0xff]
        %v786 = vld [vmem:[%s249 + $0x6c8] sm:$0xff]
        %v787 = vld [vmem:[%s249 + $0x6d0] sm:$0xff]
        %v788 = vld [vmem:[%s249 + $0x6d8] sm:$0xff]
        %v789 = vld [vmem:[%s249 + $0x6e0] sm:$0xff]
        %v790 = vld [vmem:[%s249 + $0x6e8] sm:$0xff]
        %v791 = vld [vmem:[%s249 + $0x6f0] sm:$0xff]
        %v792 = vld [vmem:[%s249 + $0x6f8] sm:$0xff]
        %v793 = vld [vmem:[%s249 + $0x700] sm:$0xff]
        %v794 = vld [vmem:[%s249 + $0x708] sm:$0xff]
        %v795 = vld [vmem:[%s249 + $0x710] sm:$0xff]
        %v796 = vld [vmem:[%s249 + $0x718] sm:$0xff]
        %v797 = vld [vmem:[%s249 + $0x720] sm:$0xff]
        %v798 = vld [vmem:[%s249 + $0x728] sm:$0xff]
        %v799 = vld [vmem:[%s249 + $0x730] sm:$0xff]
        %v800 = vld [vmem:[%s249 + $0x738] sm:$0xff]
        %v801 = vld [vmem:[%s249 + $0x740] sm:$0xff]
        %v802 = vld [vmem:[%s249 + $0x748] sm:$0xff]
        %v803 = vld [vmem:[%s249 + $0x750] sm:$0xff]
        %v804 = vld [vmem:[%s249 + $0x758] sm:$0xff]
        %v805 = vld [vmem:[%s249 + $0x760] sm:$0xff]
        %v806 = vld [vmem:[%s249 + $0x768] sm:$0xff]
        %v807 = vld [vmem:[%s249 + $0x770] sm:$0xff]
        %v808 = vld [vmem:[%s249 + $0x778] sm:$0xff]
        %v809 = vld [vmem:[%s249 + $0x780] sm:$0xff]
        %v810 = vld [vmem:[%s249 + $0x788] sm:$0xff]
        %v811 = vld [vmem:[%s249 + $0x790] sm:$0xff]
        %v812 = vld [vmem:[%s249 + $0x798] sm:$0xff]
        %v813 = vld [vmem:[%s249 + $0x7a0] sm:$0xff]
        %v814 = vld [vmem:[%s249 + $0x7a8] sm:$0xff]
        %v815 = vld [vmem:[%s249 + $0x7b0] sm:$0xff]
        %v816 = vld [vmem:[%s249 + $0x7b8] sm:$0xff]
        %v817 = vld [vmem:[%s249 + $0x7c0] sm:$0xff]
        %v818 = vld [vmem:[%s249 + $0x7c8] sm:$0xff]
        %v819 = vld [vmem:[%s249 + $0x7d0] sm:$0xff]
        %v820 = vld [vmem:[%s249 + $0x7d8] sm:$0xff]
        %v821 = vld [vmem:[%s249 + $0x7e0] sm:$0xff]
        %v822 = vld [vmem:[%s249 + $0x7e8] sm:$0xff]
        %v823 = vld [vmem:[%s249 + $0x7f0] sm:$0xff]
        %v824 = vld [vmem:[%s249 + $0x7f8] sm:$0xff]
        %v825 = vsub.f32 %v313, %v569
        %v826 = vsub.f32 %v314, %v570
        %v827 = vsub.f32 %v315, %v571
        %v828 = vsub.f32 %v316, %v572
        %v829 = vsub.f32 %v317, %v573
        %v830 = vsub.f32 %v318, %v574
        %v831 = vsub.f32 %v319, %v575
        %v832 = vsub.f32 %v320, %v576
        %v833 = vsub.f32 %v321, %v577
        %v834 = vsub.f32 %v322, %v578
        %v835 = vsub.f32 %v323, %v579
        %v836 = vsub.f32 %v324, %v580
        %v837 = vsub.f32 %v325, %v581
        %v838 = vsub.f32 %v326, %v582
        %v839 = vsub.f32 %v327, %v583
        %v840 = vsub.f32 %v328, %v584
        %v841 = vsub.f32 %v329, %v585
        %v842 = vsub.f32 %v330, %v586
        %v843 = vsub.f32 %v331, %v587
        %v844 = vsub.f32 %v332, %v588
        %v845 = vsub.f32 %v333, %v589
        %v846 = vsub.f32 %v334, %v590
        %v847 = vsub.f32 %v335, %v591
        %v848 = vsub.f32 %v336, %v592
        %v849 = vsub.f32 %v337, %v593
        %v850 = vsub.f32 %v338, %v594
        %v851 = vsub.f32 %v339, %v595
        %v852 = vsub.f32 %v340, %v596
        %v853 = vsub.f32 %v341, %v597
        %v854 = vsub.f32 %v342, %v598
        %v855 = vsub.f32 %v343, %v599
        %v856 = vsub.f32 %v344, %v600
        %v857 = vsub.f32 %v345, %v601
        %v858 = vsub.f32 %v346, %v602
        %v859 = vsub.f32 %v347, %v603
        %v860 = vsub.f32 %v348, %v604
        %v861 = vsub.f32 %v349, %v605
        %v862 = vsub.f32 %v350, %v606
        %v863 = vsub.f32 %v351, %v607
        %v864 = vsub.f32 %v352, %v608
        %v865 = vsub.f32 %v353, %v609
        %v866 = vsub.f32 %v354, %v610
        %v867 = vsub.f32 %v355, %v611
        %v868 = vsub.f32 %v356, %v612
        %v869 = vsub.f32 %v357, %v613
        %v870 = vsub.f32 %v358, %v614
        %v871 = vsub.f32 %v359, %v615
        %v872 = vsub.f32 %v360, %v616
        %v873 = vsub.f32 %v361, %v617
        %v874 = vsub.f32 %v362, %v618
        %v875 = vsub.f32 %v363, %v619
        %v876 = vsub.f32 %v364, %v620
        %v877 = vsub.f32 %v365, %v621
        %v878 = vsub.f32 %v366, %v622
        %v879 = vsub.f32 %v367, %v623
        %v880 = vsub.f32 %v368, %v624
        %v881 = vsub.f32 %v369, %v625
        %v882 = vsub.f32 %v370, %v626
        %v883 = vsub.f32 %v371, %v627
        %v884 = vsub.f32 %v372, %v628
        %v885 = vsub.f32 %v373, %v629
        %v886 = vsub.f32 %v374, %v630
        %v887 = vsub.f32 %v375, %v631
        %v888 = vsub.f32 %v376, %v632
        %v889 = vsub.f32 %v377, %v633
        %v890 = vsub.f32 %v378, %v634
        %v891 = vsub.f32 %v379, %v635
        %v892 = vsub.f32 %v380, %v636
        %v893 = vsub.f32 %v381, %v637
        %v894 = vsub.f32 %v382, %v638
        %v895 = vsub.f32 %v383, %v639
        %v896 = vsub.f32 %v384, %v640
        %v897 = vsub.f32 %v385, %v641
        %v898 = vsub.f32 %v386, %v642
        %v899 = vsub.f32 %v387, %v643
        %v900 = vsub.f32 %v388, %v644
        %v901 = vsub.f32 %v389, %v645
        %v902 = vsub.f32 %v390, %v646
        %v903 = vsub.f32 %v391, %v647
        %v904 = vsub.f32 %v392, %v648
        %v905 = vsub.f32 %v393, %v649
        %v906 = vsub.f32 %v394, %v650
        %v907 = vsub.f32 %v395, %v651
        %v908 = vsub.f32 %v396, %v652
        %v909 = vsub.f32 %v397, %v653
        %v910 = vsub.f32 %v398, %v654
        %v911 = vsub.f32 %v399, %v655
        %v912 = vsub.f32 %v400, %v656
        %v913 = vsub.f32 %v401, %v657
        %v914 = vsub.f32 %v402, %v658
        %v915 = vsub.f32 %v403, %v659
        %v916 = vsub.f32 %v404, %v660
        %v917 = vsub.f32 %v405, %v661
        %v918 = vsub.f32 %v406, %v662
        %v919 = vsub.f32 %v407, %v663
        %v920 = vsub.f32 %v408, %v664
        %v921 = vsub.f32 %v409, %v665
        %v922 = vsub.f32 %v410, %v666
        %v923 = vsub.f32 %v411, %v667
        %v924 = vsub.f32 %v412, %v668
        %v925 = vsub.f32 %v413, %v669
        %v926 = vsub.f32 %v414, %v670
        %v927 = vsub.f32 %v415, %v671
        %v928 = vsub.f32 %v416, %v672
        %v929 = vsub.f32 %v417, %v673
        %v930 = vsub.f32 %v418, %v674
        %v931 = vsub.f32 %v419, %v675
        %v932 = vsub.f32 %v420, %v676
        %v933 = vsub.f32 %v421, %v677
        %v934 = vsub.f32 %v422, %v678
        %v935 = vsub.f32 %v423, %v679
        %v936 = vsub.f32 %v424, %v680
        %v937 = vsub.f32 %v425, %v681
        %v938 = vsub.f32 %v426, %v682
        %v939 = vsub.f32 %v427, %v683
        %v940 = vsub.f32 %v428, %v684
        %v941 = vsub.f32 %v429, %v685
        %v942 = vsub.f32 %v430, %v686
        %v943 = vsub.f32 %v431, %v687
        %v944 = vsub.f32 %v432, %v688
        %v945 = vsub.f32 %v433, %v689
        %v946 = vsub.f32 %v434, %v690
        %v947 = vsub.f32 %v435, %v691
        %v948 = vsub.f32 %v436, %v692
        %v949 = vsub.f32 %v437, %v693
        %v950 = vsub.f32 %v438, %v694
        %v951 = vsub.f32 %v439, %v695
        %v952 = vsub.f32 %v440, %v696
        %v953 = vsub.f32 %v441, %v697
        %v954 = vsub.f32 %v442, %v698
        %v955 = vsub.f32 %v443, %v699
        %v956 = vsub.f32 %v444, %v700
        %v957 = vsub.f32 %v445, %v701
        %v958 = vsub.f32 %v446, %v702
        %v959 = vsub.f32 %v447, %v703
        %v960 = vsub.f32 %v448, %v704
        %v961 = vsub.f32 %v449, %v705
        %v962 = vsub.f32 %v450, %v706
        %v963 = vsub.f32 %v451, %v707
        %v964 = vsub.f32 %v452, %v708
        %v965 = vsub.f32 %v453, %v709
        %v966 = vsub.f32 %v454, %v710
        %v967 = vsub.f32 %v455, %v711
        %v968 = vsub.f32 %v456, %v712
        %v969 = vsub.f32 %v457, %v713
        %v970 = vsub.f32 %v458, %v714
        %v971 = vsub.f32 %v459, %v715
        %v972 = vsub.f32 %v460, %v716
        %v973 = vsub.f32 %v461, %v717
        %v974 = vsub.f32 %v462, %v718
        %v975 = vsub.f32 %v463, %v719
        %v976 = vsub.f32 %v464, %v720
        %v977 = vsub.f32 %v465, %v721
        %v978 = vsub.f32 %v466, %v722
        %v979 = vsub.f32 %v467, %v723
        %v980 = vsub.f32 %v468, %v724
        %v981 = vsub.f32 %v469, %v725
        %v982 = vsub.f32 %v470, %v726
        %v983 = vsub.f32 %v471, %v727
        %v984 = vsub.f32 %v472, %v728
        %v985 = vsub.f32 %v473, %v729
        %v986 = vsub.f32 %v474, %v730
        %v987 = vsub.f32 %v475, %v731
        %v988 = vsub.f32 %v476, %v732
        %v989 = vsub.f32 %v477, %v733
        %v990 = vsub.f32 %v478, %v734
        %v991 = vsub.f32 %v479, %v735
        %v992 = vsub.f32 %v480, %v736
        %v993 = vsub.f32 %v481, %v737
        %v994 = vsub.f32 %v482, %v738
        %v995 = vsub.f32 %v483, %v739
        %v996 = vsub.f32 %v484, %v740
        %v997 = vsub.f32 %v485, %v741
        %v998 = vsub.f32 %v486, %v742
        %v999 = vsub.f32 %v487, %v743
        %v1000 = vsub.f32 %v488, %v744
        %v1001 = vsub.f32 %v489, %v745
        %v1002 = vsub.f32 %v490, %v746
        %v1003 = vsub.f32 %v491, %v747
        %v1004 = vsub.f32 %v492, %v748
        %v1005 = vsub.f32 %v493, %v749
        %v1006 = vsub.f32 %v494, %v750
        %v1007 = vsub.f32 %v495, %v751
        %v1008 = vsub.f32 %v496, %v752
        %v1009 = vsub.f32 %v497, %v753
        %v1010 = vsub.f32 %v498, %v754
        %v1011 = vsub.f32 %v499, %v755
        %v1012 = vsub.f32 %v500, %v756
        %v1013 = vsub.f32 %v501, %v757
        %v1014 = vsub.f32 %v502, %v758
        %v1015 = vsub.f32 %v503, %v759
        %v1016 = vsub.f32 %v504, %v760
        %v1017 = vsub.f32 %v505, %v761
        %v1018 = vsub.f32 %v506, %v762
        %v1019 = vsub.f32 %v507, %v763
        %v1020 = vsub.f32 %v508, %v764
        %v1021 = vsub.f32 %v509, %v765
        %v1022 = vsub.f32 %v510, %v766
        %v1023 = vsub.f32 %v511, %v767
        %v1024 = vsub.f32 %v512, %v768
        %v1025 = vsub.f32 %v513, %v769
        %v1026 = vsub.f32 %v514, %v770
        %v1027 = vsub.f32 %v515, %v771
        %v1028 = vsub.f32 %v516, %v772
        %v1029 = vsub.f32 %v517, %v773
        %v1030 = vsub.f32 %v518, %v774
        %v1031 = vsub.f32 %v519, %v775
        %v1032 = vsub.f32 %v520, %v776
        %v1033 = vsub.f32 %v521, %v777
        %v1034 = vsub.f32 %v522, %v778
        %v1035 = vsub.f32 %v523, %v779
        %v1036 = vsub.f32 %v524, %v780
        %v1037 = vsub.f32 %v525, %v781
        %v1038 = vsub.f32 %v526, %v782
        %v1039 = vsub.f32 %v527, %v783
        %v1040 = vsub.f32 %v528, %v784
        %v1041 = vsub.f32 %v529, %v785
        %v1042 = vsub.f32 %v530, %v786
        %v1043 = vsub.f32 %v531, %v787
        %v1044 = vsub.f32 %v532, %v788
        %v1045 = vsub.f32 %v533, %v789
        %v1046 = vsub.f32 %v534, %v790
        %v1047 = vsub.f32 %v535, %v791
        %v1048 = vsub.f32 %v536, %v792
        %v1049 = vsub.f32 %v537, %v793
        %v1050 = vsub.f32 %v538, %v794
        %v1051 = vsub.f32 %v539, %v795
        %v1052 = vsub.f32 %v540, %v796
        %v1053 = vsub.f32 %v541, %v797
        %v1054 = vsub.f32 %v542, %v798
        %v1055 = vsub.f32 %v543, %v799
        %v1056 = vsub.f32 %v544, %v800
        %v1057 = vsub.f32 %v545, %v801
        %v1058 = vsub.f32 %v546, %v802
        %v1059 = vsub.f32 %v547, %v803
        %v1060 = vsub.f32 %v548, %v804
        %v1061 = vsub.f32 %v549, %v805
        %v1062 = vsub.f32 %v550, %v806
        %v1063 = vsub.f32 %v551, %v807
        %v1064 = vsub.f32 %v552, %v808
        %v1065 = vsub.f32 %v553, %v809
        %v1066 = vsub.f32 %v554, %v810
        %v1067 = vsub.f32 %v555, %v811
        %v1068 = vsub.f32 %v556, %v812
        %v1069 = vsub.f32 %v557, %v813
        %v1070 = vsub.f32 %v558, %v814
        %v1071 = vsub.f32 %v559, %v815
        %v1072 = vsub.f32 %v560, %v816
        %v1073 = vsub.f32 %v561, %v817
        %v1074 = vsub.f32 %v562, %v818
        %v1075 = vsub.f32 %v563, %v819
        %v1076 = vsub.f32 %v564, %v820
        %v1077 = vsub.f32 %v565, %v821
        %v1078 = vsub.f32 %v566, %v822
        %v1079 = vsub.f32 %v567, %v823
        %v1080 = vsub.f32 %v568, %v824
        %v1081 = vld [vmem:[%s259] sm:$0xff]
        %v1082 = vld [vmem:[%s259 + $0x8] sm:$0xff]
        %v1083 = vld [vmem:[%s259 + $0x10] sm:$0xff]
        %v1084 = vld [vmem:[%s259 + $0x18] sm:$0xff]
        %v1085 = vld [vmem:[%s259 + $0x20] sm:$0xff]
        %v1086 = vld [vmem:[%s259 + $0x28] sm:$0xff]
        %v1087 = vld [vmem:[%s259 + $0x30] sm:$0xff]
        %v1088 = vld [vmem:[%s259 + $0x38] sm:$0xff]
        %v1089 = vld [vmem:[%s259 + $0x40] sm:$0xff]
        %v1090 = vld [vmem:[%s259 + $0x48] sm:$0xff]
        %v1091 = vld [vmem:[%s259 + $0x50] sm:$0xff]
        %v1092 = vld [vmem:[%s259 + $0x58] sm:$0xff]
        %v1093 = vld [vmem:[%s259 + $0x60] sm:$0xff]
        %v1094 = vld [vmem:[%s259 + $0x68] sm:$0xff]
        %v1095 = vld [vmem:[%s259 + $0x70] sm:$0xff]
        %v1096 = vld [vmem:[%s259 + $0x78] sm:$0xff]
        %v1097 = vld [vmem:[%s259 + $0x80] sm:$0xff]
        %v1098 = vld [vmem:[%s259 + $0x88] sm:$0xff]
        %v1099 = vld [vmem:[%s259 + $0x90] sm:$0xff]
        %v1100 = vld [vmem:[%s259 + $0x98] sm:$0xff]
        %v1101 = vld [vmem:[%s259 + $0xa0] sm:$0xff]
        %v1102 = vld [vmem:[%s259 + $0xa8] sm:$0xff]
        %v1103 = vld [vmem:[%s259 + $0xb0] sm:$0xff]
        %v1104 = vld [vmem:[%s259 + $0xb8] sm:$0xff]
        %v1105 = vld [vmem:[%s259 + $0xc0] sm:$0xff]
        %v1106 = vld [vmem:[%s259 + $0xc8] sm:$0xff]
        %v1107 = vld [vmem:[%s259 + $0xd0] sm:$0xff]
        %v1108 = vld [vmem:[%s259 + $0xd8] sm:$0xff]
        %v1109 = vld [vmem:[%s259 + $0xe0] sm:$0xff]
        %v1110 = vld [vmem:[%s259 + $0xe8] sm:$0xff]
        %v1111 = vld [vmem:[%s259 + $0xf0] sm:$0xff]
        %v1112 = vld [vmem:[%s259 + $0xf8] sm:$0xff]
        %v1113 = vld [vmem:[%s259 + $0x100] sm:$0xff]
        %v1114 = vld [vmem:[%s259 + $0x108] sm:$0xff]
        %v1115 = vld [vmem:[%s259 + $0x110] sm:$0xff]
        %v1116 = vld [vmem:[%s259 + $0x118] sm:$0xff]
        %v1117 = vld [vmem:[%s259 + $0x120] sm:$0xff]
        %v1118 = vld [vmem:[%s259 + $0x128] sm:$0xff]
        %v1119 = vld [vmem:[%s259 + $0x130] sm:$0xff]
        %v1120 = vld [vmem:[%s259 + $0x138] sm:$0xff]
        %v1121 = vld [vmem:[%s259 + $0x140] sm:$0xff]
        %v1122 = vld [vmem:[%s259 + $0x148] sm:$0xff]
        %v1123 = vld [vmem:[%s259 + $0x150] sm:$0xff]
        %v1124 = vld [vmem:[%s259 + $0x158] sm:$0xff]
        %v1125 = vld [vmem:[%s259 + $0x160] sm:$0xff]
        %v1126 = vld [vmem:[%s259 + $0x168] sm:$0xff]
        %v1127 = vld [vmem:[%s259 + $0x170] sm:$0xff]
        %v1128 = vld [vmem:[%s259 + $0x178] sm:$0xff]
        %v1129 = vld [vmem:[%s259 + $0x180] sm:$0xff]
        %v1130 = vld [vmem:[%s259 + $0x188] sm:$0xff]
        %v1131 = vld [vmem:[%s259 + $0x190] sm:$0xff]
        %v1132 = vld [vmem:[%s259 + $0x198] sm:$0xff]
        %v1133 = vld [vmem:[%s259 + $0x1a0] sm:$0xff]
        %v1134 = vld [vmem:[%s259 + $0x1a8] sm:$0xff]
        %v1135 = vld [vmem:[%s259 + $0x1b0] sm:$0xff]
        %v1136 = vld [vmem:[%s259 + $0x1b8] sm:$0xff]
        %v1137 = vld [vmem:[%s259 + $0x1c0] sm:$0xff]
        %v1138 = vld [vmem:[%s259 + $0x1c8] sm:$0xff]
        %v1139 = vld [vmem:[%s259 + $0x1d0] sm:$0xff]
        %v1140 = vld [vmem:[%s259 + $0x1d8] sm:$0xff]
        %v1141 = vld [vmem:[%s259 + $0x1e0] sm:$0xff]
        %v1142 = vld [vmem:[%s259 + $0x1e8] sm:$0xff]
        %v1143 = vld [vmem:[%s259 + $0x1f0] sm:$0xff]
        %v1144 = vld [vmem:[%s259 + $0x1f8] sm:$0xff]
        %v1145 = vld [vmem:[%s259 + $0x200] sm:$0xff]
        %v1146 = vld [vmem:[%s259 + $0x208] sm:$0xff]
        %v1147 = vld [vmem:[%s259 + $0x210] sm:$0xff]
        %v1148 = vld [vmem:[%s259 + $0x218] sm:$0xff]
        %v1149 = vld [vmem:[%s259 + $0x220] sm:$0xff]
        %v1150 = vld [vmem:[%s259 + $0x228] sm:$0xff]
        %v1151 = vld [vmem:[%s259 + $0x230] sm:$0xff]
        %v1152 = vld [vmem:[%s259 + $0x238] sm:$0xff]
        %v1153 = vld [vmem:[%s259 + $0x240] sm:$0xff]
        %v1154 = vld [vmem:[%s259 + $0x248] sm:$0xff]
        %v1155 = vld [vmem:[%s259 + $0x250] sm:$0xff]
        %v1156 = vld [vmem:[%s259 + $0x258] sm:$0xff]
        %v1157 = vld [vmem:[%s259 + $0x260] sm:$0xff]
        %v1158 = vld [vmem:[%s259 + $0x268] sm:$0xff]
        %v1159 = vld [vmem:[%s259 + $0x270] sm:$0xff]
        %v1160 = vld [vmem:[%s259 + $0x278] sm:$0xff]
        %v1161 = vld [vmem:[%s259 + $0x280] sm:$0xff]
        %v1162 = vld [vmem:[%s259 + $0x288] sm:$0xff]
        %v1163 = vld [vmem:[%s259 + $0x290] sm:$0xff]
        %v1164 = vld [vmem:[%s259 + $0x298] sm:$0xff]
        %v1165 = vld [vmem:[%s259 + $0x2a0] sm:$0xff]
        %v1166 = vld [vmem:[%s259 + $0x2a8] sm:$0xff]
        %v1167 = vld [vmem:[%s259 + $0x2b0] sm:$0xff]
        %v1168 = vld [vmem:[%s259 + $0x2b8] sm:$0xff]
        %v1169 = vld [vmem:[%s259 + $0x2c0] sm:$0xff]
        %v1170 = vld [vmem:[%s259 + $0x2c8] sm:$0xff]
        %v1171 = vld [vmem:[%s259 + $0x2d0] sm:$0xff]
        %v1172 = vld [vmem:[%s259 + $0x2d8] sm:$0xff]
        %v1173 = vld [vmem:[%s259 + $0x2e0] sm:$0xff]
        %v1174 = vld [vmem:[%s259 + $0x2e8] sm:$0xff]
        %v1175 = vld [vmem:[%s259 + $0x2f0] sm:$0xff]
        %v1176 = vld [vmem:[%s259 + $0x2f8] sm:$0xff]
        %v1177 = vld [vmem:[%s259 + $0x300] sm:$0xff]
        %v1178 = vld [vmem:[%s259 + $0x308] sm:$0xff]
        %v1179 = vld [vmem:[%s259 + $0x310] sm:$0xff]
        %v1180 = vld [vmem:[%s259 + $0x318] sm:$0xff]
        %v1181 = vld [vmem:[%s259 + $0x320] sm:$0xff]
        %v1182 = vld [vmem:[%s259 + $0x328] sm:$0xff]
        %v1183 = vld [vmem:[%s259 + $0x330] sm:$0xff]
        %v1184 = vld [vmem:[%s259 + $0x338] sm:$0xff]
        %v1185 = vld [vmem:[%s259 + $0x340] sm:$0xff]
        %v1186 = vld [vmem:[%s259 + $0x348] sm:$0xff]
        %v1187 = vld [vmem:[%s259 + $0x350] sm:$0xff]
        %v1188 = vld [vmem:[%s259 + $0x358] sm:$0xff]
        %v1189 = vld [vmem:[%s259 + $0x360] sm:$0xff]
        %v1190 = vld [vmem:[%s259 + $0x368] sm:$0xff]
        %v1191 = vld [vmem:[%s259 + $0x370] sm:$0xff]
        %v1192 = vld [vmem:[%s259 + $0x378] sm:$0xff]
        %v1193 = vld [vmem:[%s259 + $0x380] sm:$0xff]
        %v1194 = vld [vmem:[%s259 + $0x388] sm:$0xff]
        %v1195 = vld [vmem:[%s259 + $0x390] sm:$0xff]
        %v1196 = vld [vmem:[%s259 + $0x398] sm:$0xff]
        %v1197 = vld [vmem:[%s259 + $0x3a0] sm:$0xff]
        %v1198 = vld [vmem:[%s259 + $0x3a8] sm:$0xff]
        %v1199 = vld [vmem:[%s259 + $0x3b0] sm:$0xff]
        %v1200 = vld [vmem:[%s259 + $0x3b8] sm:$0xff]
        %v1201 = vld [vmem:[%s259 + $0x3c0] sm:$0xff]
        %v1202 = vld [vmem:[%s259 + $0x3c8] sm:$0xff]
        %v1203 = vld [vmem:[%s259 + $0x3d0] sm:$0xff]
        %v1204 = vld [vmem:[%s259 + $0x3d8] sm:$0xff]
        %v1205 = vld [vmem:[%s259 + $0x3e0] sm:$0xff]
        %v1206 = vld [vmem:[%s259 + $0x3e8] sm:$0xff]
        %v1207 = vld [vmem:[%s259 + $0x3f0] sm:$0xff]
        %v1208 = vld [vmem:[%s259 + $0x3f8] sm:$0xff]
        %v1209 = vld [vmem:[%s259 + $0x400] sm:$0xff]
        %v1210 = vld [vmem:[%s259 + $0x408] sm:$0xff]
        %v1211 = vld [vmem:[%s259 + $0x410] sm:$0xff]
        %v1212 = vld [vmem:[%s259 + $0x418] sm:$0xff]
        %v1213 = vld [vmem:[%s259 + $0x420] sm:$0xff]
        %v1214 = vld [vmem:[%s259 + $0x428] sm:$0xff]
        %v1215 = vld [vmem:[%s259 + $0x430] sm:$0xff]
        %v1216 = vld [vmem:[%s259 + $0x438] sm:$0xff]
        %v1217 = vld [vmem:[%s259 + $0x440] sm:$0xff]
        %v1218 = vld [vmem:[%s259 + $0x448] sm:$0xff]
        %v1219 = vld [vmem:[%s259 + $0x450] sm:$0xff]
        %v1220 = vld [vmem:[%s259 + $0x458] sm:$0xff]
        %v1221 = vld [vmem:[%s259 + $0x460] sm:$0xff]
        %v1222 = vld [vmem:[%s259 + $0x468] sm:$0xff]
        %v1223 = vld [vmem:[%s259 + $0x470] sm:$0xff]
        %v1224 = vld [vmem:[%s259 + $0x478] sm:$0xff]
        %v1225 = vld [vmem:[%s259 + $0x480] sm:$0xff]
        %v1226 = vld [vmem:[%s259 + $0x488] sm:$0xff]
        %v1227 = vld [vmem:[%s259 + $0x490] sm:$0xff]
        %v1228 = vld [vmem:[%s259 + $0x498] sm:$0xff]
        %v1229 = vld [vmem:[%s259 + $0x4a0] sm:$0xff]
        %v1230 = vld [vmem:[%s259 + $0x4a8] sm:$0xff]
        %v1231 = vld [vmem:[%s259 + $0x4b0] sm:$0xff]
        %v1232 = vld [vmem:[%s259 + $0x4b8] sm:$0xff]
        %v1233 = vld [vmem:[%s259 + $0x4c0] sm:$0xff]
        %v1234 = vld [vmem:[%s259 + $0x4c8] sm:$0xff]
        %v1235 = vld [vmem:[%s259 + $0x4d0] sm:$0xff]
        %v1236 = vld [vmem:[%s259 + $0x4d8] sm:$0xff]
        %v1237 = vld [vmem:[%s259 + $0x4e0] sm:$0xff]
        %v1238 = vld [vmem:[%s259 + $0x4e8] sm:$0xff]
        %v1239 = vld [vmem:[%s259 + $0x4f0] sm:$0xff]
        %v1240 = vld [vmem:[%s259 + $0x4f8] sm:$0xff]
        %v1241 = vld [vmem:[%s259 + $0x500] sm:$0xff]
        %v1242 = vld [vmem:[%s259 + $0x508] sm:$0xff]
        %v1243 = vld [vmem:[%s259 + $0x510] sm:$0xff]
        %v1244 = vld [vmem:[%s259 + $0x518] sm:$0xff]
        %v1245 = vld [vmem:[%s259 + $0x520] sm:$0xff]
        %v1246 = vld [vmem:[%s259 + $0x528] sm:$0xff]
        %v1247 = vld [vmem:[%s259 + $0x530] sm:$0xff]
        %v1248 = vld [vmem:[%s259 + $0x538] sm:$0xff]
        %v1249 = vld [vmem:[%s259 + $0x540] sm:$0xff]
        %v1250 = vld [vmem:[%s259 + $0x548] sm:$0xff]
        %v1251 = vld [vmem:[%s259 + $0x550] sm:$0xff]
        %v1252 = vld [vmem:[%s259 + $0x558] sm:$0xff]
        %v1253 = vld [vmem:[%s259 + $0x560] sm:$0xff]
        %v1254 = vld [vmem:[%s259 + $0x568] sm:$0xff]
        %v1255 = vld [vmem:[%s259 + $0x570] sm:$0xff]
        %v1256 = vld [vmem:[%s259 + $0x578] sm:$0xff]
        %v1257 = vld [vmem:[%s259 + $0x580] sm:$0xff]
        %v1258 = vld [vmem:[%s259 + $0x588] sm:$0xff]
        %v1259 = vld [vmem:[%s259 + $0x590] sm:$0xff]
        %v1260 = vld [vmem:[%s259 + $0x598] sm:$0xff]
        %v1261 = vld [vmem:[%s259 + $0x5a0] sm:$0xff]
        %v1262 = vld [vmem:[%s259 + $0x5a8] sm:$0xff]
        %v1263 = vld [vmem:[%s259 + $0x5b0] sm:$0xff]
        %v1264 = vld [vmem:[%s259 + $0x5b8] sm:$0xff]
        %v1265 = vld [vmem:[%s259 + $0x5c0] sm:$0xff]
        %v1266 = vld [vmem:[%s259 + $0x5c8] sm:$0xff]
        %v1267 = vld [vmem:[%s259 + $0x5d0] sm:$0xff]
        %v1268 = vld [vmem:[%s259 + $0x5d8] sm:$0xff]
        %v1269 = vld [vmem:[%s259 + $0x5e0] sm:$0xff]
        %v1270 = vld [vmem:[%s259 + $0x5e8] sm:$0xff]
        %v1271 = vld [vmem:[%s259 + $0x5f0] sm:$0xff]
        %v1272 = vld [vmem:[%s259 + $0x5f8] sm:$0xff]
        %v1273 = vld [vmem:[%s259 + $0x600] sm:$0xff]
        %v1274 = vld [vmem:[%s259 + $0x608] sm:$0xff]
        %v1275 = vld [vmem:[%s259 + $0x610] sm:$0xff]
        %v1276 = vld [vmem:[%s259 + $0x618] sm:$0xff]
        %v1277 = vld [vmem:[%s259 + $0x620] sm:$0xff]
        %v1278 = vld [vmem:[%s259 + $0x628] sm:$0xff]
        %v1279 = vld [vmem:[%s259 + $0x630] sm:$0xff]
        %v1280 = vld [vmem:[%s259 + $0x638] sm:$0xff]
        %v1281 = vld [vmem:[%s259 + $0x640] sm:$0xff]
        %v1282 = vld [vmem:[%s259 + $0x648] sm:$0xff]
        %v1283 = vld [vmem:[%s259 + $0x650] sm:$0xff]
        %v1284 = vld [vmem:[%s259 + $0x658] sm:$0xff]
        %v1285 = vld [vmem:[%s259 + $0x660] sm:$0xff]
        %v1286 = vld [vmem:[%s259 + $0x668] sm:$0xff]
        %v1287 = vld [vmem:[%s259 + $0x670] sm:$0xff]
        %v1288 = vld [vmem:[%s259 + $0x678] sm:$0xff]
        %v1289 = vld [vmem:[%s259 + $0x680] sm:$0xff]
        %v1290 = vld [vmem:[%s259 + $0x688] sm:$0xff]
        %v1291 = vld [vmem:[%s259 + $0x690] sm:$0xff]
        %v1292 = vld [vmem:[%s259 + $0x698] sm:$0xff]
        %v1293 = vld [vmem:[%s259 + $0x6a0] sm:$0xff]
        %v1294 = vld [vmem:[%s259 + $0x6a8] sm:$0xff]
        %v1295 = vld [vmem:[%s259 + $0x6b0] sm:$0xff]
        %v1296 = vld [vmem:[%s259 + $0x6b8] sm:$0xff]
        %v1297 = vld [vmem:[%s259 + $0x6c0] sm:$0xff]
        %v1298 = vld [vmem:[%s259 + $0x6c8] sm:$0xff]
        %v1299 = vld [vmem:[%s259 + $0x6d0] sm:$0xff]
        %v1300 = vld [vmem:[%s259 + $0x6d8] sm:$0xff]
        %v1301 = vld [vmem:[%s259 + $0x6e0] sm:$0xff]
        %v1302 = vld [vmem:[%s259 + $0x6e8] sm:$0xff]
        %v1303 = vld [vmem:[%s259 + $0x6f0] sm:$0xff]
        %v1304 = vld [vmem:[%s259 + $0x6f8] sm:$0xff]
        %v1305 = vld [vmem:[%s259 + $0x700] sm:$0xff]
        %v1306 = vld [vmem:[%s259 + $0x708] sm:$0xff]
        %v1307 = vld [vmem:[%s259 + $0x710] sm:$0xff]
        %v1308 = vld [vmem:[%s259 + $0x718] sm:$0xff]
        %v1309 = vld [vmem:[%s259 + $0x720] sm:$0xff]
        %v1310 = vld [vmem:[%s259 + $0x728] sm:$0xff]
        %v1311 = vld [vmem:[%s259 + $0x730] sm:$0xff]
        %v1312 = vld [vmem:[%s259 + $0x738] sm:$0xff]
        %v1313 = vld [vmem:[%s259 + $0x740] sm:$0xff]
        %v1314 = vld [vmem:[%s259 + $0x748] sm:$0xff]
        %v1315 = vld [vmem:[%s259 + $0x750] sm:$0xff]
        %v1316 = vld [vmem:[%s259 + $0x758] sm:$0xff]
        %v1317 = vld [vmem:[%s259 + $0x760] sm:$0xff]
        %v1318 = vld [vmem:[%s259 + $0x768] sm:$0xff]
        %v1319 = vld [vmem:[%s259 + $0x770] sm:$0xff]
        %v1320 = vld [vmem:[%s259 + $0x778] sm:$0xff]
        %v1321 = vld [vmem:[%s259 + $0x780] sm:$0xff]
        %v1322 = vld [vmem:[%s259 + $0x788] sm:$0xff]
        %v1323 = vld [vmem:[%s259 + $0x790] sm:$0xff]
        %v1324 = vld [vmem:[%s259 + $0x798] sm:$0xff]
        %v1325 = vld [vmem:[%s259 + $0x7a0] sm:$0xff]
        %v1326 = vld [vmem:[%s259 + $0x7a8] sm:$0xff]
        %v1327 = vld [vmem:[%s259 + $0x7b0] sm:$0xff]
        %v1328 = vld [vmem:[%s259 + $0x7b8] sm:$0xff]
        %v1329 = vld [vmem:[%s259 + $0x7c0] sm:$0xff]
        %v1330 = vld [vmem:[%s259 + $0x7c8] sm:$0xff]
        %v1331 = vld [vmem:[%s259 + $0x7d0] sm:$0xff]
        %v1332 = vld [vmem:[%s259 + $0x7d8] sm:$0xff]
        %v1333 = vld [vmem:[%s259 + $0x7e0] sm:$0xff]
        %v1334 = vld [vmem:[%s259 + $0x7e8] sm:$0xff]
        %v1335 = vld [vmem:[%s259 + $0x7f0] sm:$0xff]
        %v1336 = vld [vmem:[%s259 + $0x7f8] sm:$0xff]
        %v1337 = vmul.f32 %v825, %v1081
        %v1338 = vmul.f32 %v826, %v1082
        %v1339 = vmul.f32 %v827, %v1083
        %v1340 = vmul.f32 %v828, %v1084
        %v1341 = vmul.f32 %v829, %v1085
        %v1342 = vmul.f32 %v830, %v1086
        %v1343 = vmul.f32 %v831, %v1087
        %v1344 = vmul.f32 %v832, %v1088
        %v1345 = vmul.f32 %v833, %v1089
        %v1346 = vmul.f32 %v834, %v1090
        %v1347 = vmul.f32 %v835, %v1091
        %v1348 = vmul.f32 %v836, %v1092
        %v1349 = vmul.f32 %v837, %v1093
        %v1350 = vmul.f32 %v838, %v1094
        %v1351 = vmul.f32 %v839, %v1095
        %v1352 = vmul.f32 %v840, %v1096
        %v1353 = vmul.f32 %v841, %v1097
        %v1354 = vmul.f32 %v842, %v1098
        %v1355 = vmul.f32 %v843, %v1099
        %v1356 = vmul.f32 %v844, %v1100
        %v1357 = vmul.f32 %v845, %v1101
        %v1358 = vmul.f32 %v846, %v1102
        %v1359 = vmul.f32 %v847, %v1103
        %v1360 = vmul.f32 %v848, %v1104
        %v1361 = vmul.f32 %v849, %v1105
        %v1362 = vmul.f32 %v850, %v1106
        %v1363 = vmul.f32 %v851, %v1107
        %v1364 = vmul.f32 %v852, %v1108
        %v1365 = vmul.f32 %v853, %v1109
        %v1366 = vmul.f32 %v854, %v1110
        %v1367 = vmul.f32 %v855, %v1111
        %v1368 = vmul.f32 %v856, %v1112
        %v1369 = vmul.f32 %v857, %v1113
        %v1370 = vmul.f32 %v858, %v1114
        %v1371 = vmul.f32 %v859, %v1115
        %v1372 = vmul.f32 %v860, %v1116
        %v1373 = vmul.f32 %v861, %v1117
        %v1374 = vmul.f32 %v862, %v1118
        %v1375 = vmul.f32 %v863, %v1119
        %v1376 = vmul.f32 %v864, %v1120
        %v1377 = vmul.f32 %v865, %v1121
        %v1378 = vmul.f32 %v866, %v1122
        %v1379 = vmul.f32 %v867, %v1123
        %v1380 = vmul.f32 %v868, %v1124
        %v1381 = vmul.f32 %v869, %v1125
        %v1382 = vmul.f32 %v870, %v1126
        %v1383 = vmul.f32 %v871, %v1127
        %v1384 = vmul.f32 %v872, %v1128
        %v1385 = vmul.f32 %v873, %v1129
        %v1386 = vmul.f32 %v874, %v1130
        %v1387 = vmul.f32 %v875, %v1131
        %v1388 = vmul.f32 %v876, %v1132
        %v1389 = vmul.f32 %v877, %v1133
        %v1390 = vmul.f32 %v878, %v1134
        %v1391 = vmul.f32 %v879, %v1135
        %v1392 = vmul.f32 %v880, %v1136
        %v1393 = vmul.f32 %v881, %v1137
        %v1394 = vmul.f32 %v882, %v1138
        %v1395 = vmul.f32 %v883, %v1139
        %v1396 = vmul.f32 %v884, %v1140
        %v1397 = vmul.f32 %v885, %v1141
        %v1398 = vmul.f32 %v886, %v1142
        %v1399 = vmul.f32 %v887, %v1143
        %v1400 = vmul.f32 %v888, %v1144
        %v1401 = vmul.f32 %v889, %v1145
        %v1402 = vmul.f32 %v890, %v1146
        %v1403 = vmul.f32 %v891, %v1147
        %v1404 = vmul.f32 %v892, %v1148
        %v1405 = vmul.f32 %v893, %v1149
        %v1406 = vmul.f32 %v894, %v1150
        %v1407 = vmul.f32 %v895, %v1151
        %v1408 = vmul.f32 %v896, %v1152
        %v1409 = vmul.f32 %v897, %v1153
        %v1410 = vmul.f32 %v898, %v1154
        %v1411 = vmul.f32 %v899, %v1155
        %v1412 = vmul.f32 %v900, %v1156
        %v1413 = vmul.f32 %v901, %v1157
        %v1414 = vmul.f32 %v902, %v1158
        %v1415 = vmul.f32 %v903, %v1159
        %v1416 = vmul.f32 %v904, %v1160
        %v1417 = vmul.f32 %v905, %v1161
        %v1418 = vmul.f32 %v906, %v1162
        %v1419 = vmul.f32 %v907, %v1163
        %v1420 = vmul.f32 %v908, %v1164
        %v1421 = vmul.f32 %v909, %v1165
        %v1422 = vmul.f32 %v910, %v1166
        %v1423 = vmul.f32 %v911, %v1167
        %v1424 = vmul.f32 %v912, %v1168
        %v1425 = vmul.f32 %v913, %v1169
        %v1426 = vmul.f32 %v914, %v1170
        %v1427 = vmul.f32 %v915, %v1171
        %v1428 = vmul.f32 %v916, %v1172
        %v1429 = vmul.f32 %v917, %v1173
        %v1430 = vmul.f32 %v918, %v1174
        %v1431 = vmul.f32 %v919, %v1175
        %v1432 = vmul.f32 %v920, %v1176
        %v1433 = vmul.f32 %v921, %v1177
        %v1434 = vmul.f32 %v922, %v1178
        %v1435 = vmul.f32 %v923, %v1179
        %v1436 = vmul.f32 %v924, %v1180
        %v1437 = vmul.f32 %v925, %v1181
        %v1438 = vmul.f32 %v926, %v1182
        %v1439 = vmul.f32 %v927, %v1183
        %v1440 = vmul.f32 %v928, %v1184
        %v1441 = vmul.f32 %v929, %v1185
        %v1442 = vmul.f32 %v930, %v1186
        %v1443 = vmul.f32 %v931, %v1187
        %v1444 = vmul.f32 %v932, %v1188
        %v1445 = vmul.f32 %v933, %v1189
        %v1446 = vmul.f32 %v934, %v1190
        %v1447 = vmul.f32 %v935, %v1191
        %v1448 = vmul.f32 %v936, %v1192
        %v1449 = vmul.f32 %v937, %v1193
        %v1450 = vmul.f32 %v938, %v1194
        %v1451 = vmul.f32 %v939, %v1195
        %v1452 = vmul.f32 %v940, %v1196
        %v1453 = vmul.f32 %v941, %v1197
        %v1454 = vmul.f32 %v942, %v1198
        %v1455 = vmul.f32 %v943, %v1199
        %v1456 = vmul.f32 %v944, %v1200
        %v1457 = vmul.f32 %v945, %v1201
        %v1458 = vmul.f32 %v946, %v1202
        %v1459 = vmul.f32 %v947, %v1203
        %v1460 = vmul.f32 %v948, %v1204
        %v1461 = vmul.f32 %v949, %v1205
        %v1462 = vmul.f32 %v950, %v1206
        %v1463 = vmul.f32 %v951, %v1207
        %v1464 = vmul.f32 %v952, %v1208
        %v1465 = vmul.f32 %v953, %v1209
        %v1466 = vmul.f32 %v954, %v1210
        %v1467 = vmul.f32 %v955, %v1211
        %v1468 = vmul.f32 %v956, %v1212
        %v1469 = vmul.f32 %v957, %v1213
        %v1470 = vmul.f32 %v958, %v1214
        %v1471 = vmul.f32 %v959, %v1215
        %v1472 = vmul.f32 %v960, %v1216
        %v1473 = vmul.f32 %v961, %v1217
        %v1474 = vmul.f32 %v962, %v1218
        %v1475 = vmul.f32 %v963, %v1219
        %v1476 = vmul.f32 %v964, %v1220
        %v1477 = vmul.f32 %v965, %v1221
        %v1478 = vmul.f32 %v966, %v1222
        %v1479 = vmul.f32 %v967, %v1223
        %v1480 = vmul.f32 %v968, %v1224
        %v1481 = vmul.f32 %v969, %v1225
        %v1482 = vmul.f32 %v970, %v1226
        %v1483 = vmul.f32 %v971, %v1227
        %v1484 = vmul.f32 %v972, %v1228
        %v1485 = vmul.f32 %v973, %v1229
        %v1486 = vmul.f32 %v974, %v1230
        %v1487 = vmul.f32 %v975, %v1231
        %v1488 = vmul.f32 %v976, %v1232
        %v1489 = vmul.f32 %v977, %v1233
        %v1490 = vmul.f32 %v978, %v1234
        %v1491 = vmul.f32 %v979, %v1235
        %v1492 = vmul.f32 %v980, %v1236
        %v1493 = vmul.f32 %v981, %v1237
        %v1494 = vmul.f32 %v982, %v1238
        %v1495 = vmul.f32 %v983, %v1239
        %v1496 = vmul.f32 %v984, %v1240
        %v1497 = vmul.f32 %v985, %v1241
        %v1498 = vmul.f32 %v986, %v1242
        %v1499 = vmul.f32 %v987, %v1243
        %v1500 = vmul.f32 %v988, %v1244
        %v1501 = vmul.f32 %v989, %v1245
        %v1502 = vmul.f32 %v990, %v1246
        %v1503 = vmul.f32 %v991, %v1247
        %v1504 = vmul.f32 %v992, %v1248
        %v1505 = vmul.f32 %v993, %v1249
        %v1506 = vmul.f32 %v994, %v1250
        %v1507 = vmul.f32 %v995, %v1251
        %v1508 = vmul.f32 %v996, %v1252
        %v1509 = vmul.f32 %v997, %v1253
        %v1510 = vmul.f32 %v998, %v1254
        %v1511 = vmul.f32 %v999, %v1255
        %v1512 = vmul.f32 %v1000, %v1256
        %v1513 = vmul.f32 %v1001, %v1257
        %v1514 = vmul.f32 %v1002, %v1258
        %v1515 = vmul.f32 %v1003, %v1259
        %v1516 = vmul.f32 %v1004, %v1260
        %v1517 = vmul.f32 %v1005, %v1261
        %v1518 = vmul.f32 %v1006, %v1262
        %v1519 = vmul.f32 %v1007, %v1263
        %v1520 = vmul.f32 %v1008, %v1264
        %v1521 = vmul.f32 %v1009, %v1265
        %v1522 = vmul.f32 %v1010, %v1266
        %v1523 = vmul.f32 %v1011, %v1267
        %v1524 = vmul.f32 %v1012, %v1268
        %v1525 = vmul.f32 %v1013, %v1269
        %v1526 = vmul.f32 %v1014, %v1270
        %v1527 = vmul.f32 %v1015, %v1271
        %v1528 = vmul.f32 %v1016, %v1272
        %v1529 = vmul.f32 %v1017, %v1273
        %v1530 = vmul.f32 %v1018, %v1274
        %v1531 = vmul.f32 %v1019, %v1275
        %v1532 = vmul.f32 %v1020, %v1276
        %v1533 = vmul.f32 %v1021, %v1277
        %v1534 = vmul.f32 %v1022, %v1278
        %v1535 = vmul.f32 %v1023, %v1279
        %v1536 = vmul.f32 %v1024, %v1280
        %v1537 = vmul.f32 %v1025, %v1281
        %v1538 = vmul.f32 %v1026, %v1282
        %v1539 = vmul.f32 %v1027, %v1283
        %v1540 = vmul.f32 %v1028, %v1284
        %v1541 = vmul.f32 %v1029, %v1285
        %v1542 = vmul.f32 %v1030, %v1286
        %v1543 = vmul.f32 %v1031, %v1287
        %v1544 = vmul.f32 %v1032, %v1288
        %v1545 = vmul.f32 %v1033, %v1289
        %v1546 = vmul.f32 %v1034, %v1290
        %v1547 = vmul.f32 %v1035, %v1291
        %v1548 = vmul.f32 %v1036, %v1292
        %v1549 = vmul.f32 %v1037, %v1293
        %v1550 = vmul.f32 %v1038, %v1294
        %v1551 = vmul.f32 %v1039, %v1295
        %v1552 = vmul.f32 %v1040, %v1296
        %v1553 = vmul.f32 %v1041, %v1297
        %v1554 = vmul.f32 %v1042, %v1298
        %v1555 = vmul.f32 %v1043, %v1299
        %v1556 = vmul.f32 %v1044, %v1300
        %v1557 = vmul.f32 %v1045, %v1301
        %v1558 = vmul.f32 %v1046, %v1302
        %v1559 = vmul.f32 %v1047, %v1303
        %v1560 = vmul.f32 %v1048, %v1304
        %v1561 = vmul.f32 %v1049, %v1305
        %v1562 = vmul.f32 %v1050, %v1306
        %v1563 = vmul.f32 %v1051, %v1307
        %v1564 = vmul.f32 %v1052, %v1308
        %v1565 = vmul.f32 %v1053, %v1309
        %v1566 = vmul.f32 %v1054, %v1310
        %v1567 = vmul.f32 %v1055, %v1311
        %v1568 = vmul.f32 %v1056, %v1312
        %v1569 = vmul.f32 %v1057, %v1313
        %v1570 = vmul.f32 %v1058, %v1314
        %v1571 = vmul.f32 %v1059, %v1315
        %v1572 = vmul.f32 %v1060, %v1316
        %v1573 = vmul.f32 %v1061, %v1317
        %v1574 = vmul.f32 %v1062, %v1318
        %v1575 = vmul.f32 %v1063, %v1319
        %v1576 = vmul.f32 %v1064, %v1320
        %v1577 = vmul.f32 %v1065, %v1321
        %v1578 = vmul.f32 %v1066, %v1322
        %v1579 = vmul.f32 %v1067, %v1323
        %v1580 = vmul.f32 %v1068, %v1324
        %v1581 = vmul.f32 %v1069, %v1325
        %v1582 = vmul.f32 %v1070, %v1326
        %v1583 = vmul.f32 %v1071, %v1327
        %v1584 = vmul.f32 %v1072, %v1328
        %v1585 = vmul.f32 %v1073, %v1329
        %v1586 = vmul.f32 %v1074, %v1330
        %v1587 = vmul.f32 %v1075, %v1331
        %v1588 = vmul.f32 %v1076, %v1332
        %v1589 = vmul.f32 %v1077, %v1333
        %v1590 = vmul.f32 %v1078, %v1334
        %v1591 = vmul.f32 %v1079, %v1335
        %v1592 = vmul.f32 %v1080, %v1336
        %1593 = vst [vmem:[%s292] sm:$0xff] %v1337
        %1594 = vst [vmem:[%s292 + $0x8] sm:$0xff] %v1338
        %1595 = vst [vmem:[%s292 + $0x10] sm:$0xff] %v1339
        %1596 = vst [vmem:[%s292 + $0x18] sm:$0xff] %v1340
        %1597 = vst [vmem:[%s292 + $0x20] sm:$0xff] %v1341
        %1598 = vst [vmem:[%s292 + $0x28] sm:$0xff] %v1342
        %1599 = vst [vmem:[%s292 + $0x30] sm:$0xff] %v1343
        %1600 = vst [vmem:[%s292 + $0x38] sm:$0xff] %v1344
        %1601 = vst [vmem:[%s292 + $0x40] sm:$0xff] %v1345
        %1602 = vst [vmem:[%s292 + $0x48] sm:$0xff] %v1346
        %1603 = vst [vmem:[%s292 + $0x50] sm:$0xff] %v1347
        %1604 = vst [vmem:[%s292 + $0x58] sm:$0xff] %v1348
        %1605 = vst [vmem:[%s292 + $0x60] sm:$0xff] %v1349
        %1606 = vst [vmem:[%s292 + $0x68] sm:$0xff] %v1350
        %1607 = vst [vmem:[%s292 + $0x70] sm:$0xff] %v1351
        %1608 = vst [vmem:[%s292 + $0x78] sm:$0xff] %v1352
        %1609 = vst [vmem:[%s292 + $0x80] sm:$0xff] %v1353
        %1610 = vst [vmem:[%s292 + $0x88] sm:$0xff] %v1354
        %1611 = vst [vmem:[%s292 + $0x90] sm:$0xff] %v1355
        %1612 = vst [vmem:[%s292 + $0x98] sm:$0xff] %v1356
        %1613 = vst [vmem:[%s292 + $0xa0] sm:$0xff] %v1357
        %1614 = vst [vmem:[%s292 + $0xa8] sm:$0xff] %v1358
        %1615 = vst [vmem:[%s292 + $0xb0] sm:$0xff] %v1359
        %1616 = vst [vmem:[%s292 + $0xb8] sm:$0xff] %v1360
        %1617 = vst [vmem:[%s292 + $0xc0] sm:$0xff] %v1361
        %1618 = vst [vmem:[%s292 + $0xc8] sm:$0xff] %v1362
        %1619 = vst [vmem:[%s292 + $0xd0] sm:$0xff] %v1363
        %1620 = vst [vmem:[%s292 + $0xd8] sm:$0xff] %v1364
        %1621 = vst [vmem:[%s292 + $0xe0] sm:$0xff] %v1365
        %1622 = vst [vmem:[%s292 + $0xe8] sm:$0xff] %v1366
        %1623 = vst [vmem:[%s292 + $0xf0] sm:$0xff] %v1367
        %1624 = vst [vmem:[%s292 + $0xf8] sm:$0xff] %v1368
        %1625 = vst [vmem:[%s292 + $0x100] sm:$0xff] %v1369
        %1626 = vst [vmem:[%s292 + $0x108] sm:$0xff] %v1370
        %1627 = vst [vmem:[%s292 + $0x110] sm:$0xff] %v1371
        %1628 = vst [vmem:[%s292 + $0x118] sm:$0xff] %v1372
        %1629 = vst [vmem:[%s292 + $0x120] sm:$0xff] %v1373
        %1630 = vst [vmem:[%s292 + $0x128] sm:$0xff] %v1374
        %1631 = vst [vmem:[%s292 + $0x130] sm:$0xff] %v1375
        %1632 = vst [vmem:[%s292 + $0x138] sm:$0xff] %v1376
        %1633 = vst [vmem:[%s292 + $0x140] sm:$0xff] %v1377
        %1634 = vst [vmem:[%s292 + $0x148] sm:$0xff] %v1378
        %1635 = vst [vmem:[%s292 + $0x150] sm:$0xff] %v1379
        %1636 = vst [vmem:[%s292 + $0x158] sm:$0xff] %v1380
        %1637 = vst [vmem:[%s292 + $0x160] sm:$0xff] %v1381
        %1638 = vst [vmem:[%s292 + $0x168] sm:$0xff] %v1382
        %1639 = vst [vmem:[%s292 + $0x170] sm:$0xff] %v1383
        %1640 = vst [vmem:[%s292 + $0x178] sm:$0xff] %v1384
        %1641 = vst [vmem:[%s292 + $0x180] sm:$0xff] %v1385
        %1642 = vst [vmem:[%s292 + $0x188] sm:$0xff] %v1386
        %1643 = vst [vmem:[%s292 + $0x190] sm:$0xff] %v1387
        %1644 = vst [vmem:[%s292 + $0x198] sm:$0xff] %v1388
        %1645 = vst [vmem:[%s292 + $0x1a0] sm:$0xff] %v1389
        %1646 = vst [vmem:[%s292 + $0x1a8] sm:$0xff] %v1390
        %1647 = vst [vmem:[%s292 + $0x1b0] sm:$0xff] %v1391
        %1648 = vst [vmem:[%s292 + $0x1b8] sm:$0xff] %v1392
        %1649 = vst [vmem:[%s292 + $0x1c0] sm:$0xff] %v1393
        %1650 = vst [vmem:[%s292 + $0x1c8] sm:$0xff] %v1394
        %1651 = vst [vmem:[%s292 + $0x1d0] sm:$0xff] %v1395
        %1652 = vst [vmem:[%s292 + $0x1d8] sm:$0xff] %v1396
        %1653 = vst [vmem:[%s292 + $0x1e0] sm:$0xff] %v1397
        %1654 = vst [vmem:[%s292 + $0x1e8] sm:$0xff] %v1398
        %1655 = vst [vmem:[%s292 + $0x1f0] sm:$0xff] %v1399
        %1656 = vst [vmem:[%s292 + $0x1f8] sm:$0xff] %v1400
        %1657 = vst [vmem:[%s292 + $0x200] sm:$0xff] %v1401
        %1658 = vst [vmem:[%s292 + $0x208] sm:$0xff] %v1402
        %1659 = vst [vmem:[%s292 + $0x210] sm:$0xff] %v1403
        %1660 = vst [vmem:[%s292 + $0x218] sm:$0xff] %v1404
        %1661 = vst [vmem:[%s292 + $0x220] sm:$0xff] %v1405
        %1662 = vst [vmem:[%s292 + $0x228] sm:$0xff] %v1406
        %1663 = vst [vmem:[%s292 + $0x230] sm:$0xff] %v1407
        %1664 = vst [vmem:[%s292 + $0x238] sm:$0xff] %v1408
        %1665 = vst [vmem:[%s292 + $0x240] sm:$0xff] %v1409
        %1666 = vst [vmem:[%s292 + $0x248] sm:$0xff] %v1410
        %1667 = vst [vmem:[%s292 + $0x250] sm:$0xff] %v1411
        %1668 = vst [vmem:[%s292 + $0x258] sm:$0xff] %v1412
        %1669 = vst [vmem:[%s292 + $0x260] sm:$0xff] %v1413
        %1670 = vst [vmem:[%s292 + $0x268] sm:$0xff] %v1414
        %1671 = vst [vmem:[%s292 + $0x270] sm:$0xff] %v1415
        %1672 = vst [vmem:[%s292 + $0x278] sm:$0xff] %v1416
        %1673 = vst [vmem:[%s292 + $0x280] sm:$0xff] %v1417
        %1674 = vst [vmem:[%s292 + $0x288] sm:$0xff] %v1418
        %1675 = vst [vmem:[%s292 + $0x290] sm:$0xff] %v1419
        %1676 = vst [vmem:[%s292 + $0x298] sm:$0xff] %v1420
        %1677 = vst [vmem:[%s292 + $0x2a0] sm:$0xff] %v1421
        %1678 = vst [vmem:[%s292 + $0x2a8] sm:$0xff] %v1422
        %1679 = vst [vmem:[%s292 + $0x2b0] sm:$0xff] %v1423
        %1680 = vst [vmem:[%s292 + $0x2b8] sm:$0xff] %v1424
        %1681 = vst [vmem:[%s292 + $0x2c0] sm:$0xff] %v1425
        %1682 = vst [vmem:[%s292 + $0x2c8] sm:$0xff] %v1426
        %1683 = vst [vmem:[%s292 + $0x2d0] sm:$0xff] %v1427
        %1684 = vst [vmem:[%s292 + $0x2d8] sm:$0xff] %v1428
        %1685 = vst [vmem:[%s292 + $0x2e0] sm:$0xff] %v1429
        %1686 = vst [vmem:[%s292 + $0x2e8] sm:$0xff] %v1430
        %1687 = vst [vmem:[%s292 + $0x2f0] sm:$0xff] %v1431
        %1688 = vst [vmem:[%s292 + $0x2f8] sm:$0xff] %v1432
        %1689 = vst [vmem:[%s292 + $0x300] sm:$0xff] %v1433
        %1690 = vst [vmem:[%s292 + $0x308] sm:$0xff] %v1434
        %1691 = vst [vmem:[%s292 + $0x310] sm:$0xff] %v1435
        %1692 = vst [vmem:[%s292 + $0x318] sm:$0xff] %v1436
        %1693 = vst [vmem:[%s292 + $0x320] sm:$0xff] %v1437
        %1694 = vst [vmem:[%s292 + $0x328] sm:$0xff] %v1438
        %1695 = vst [vmem:[%s292 + $0x330] sm:$0xff] %v1439
        %1696 = vst [vmem:[%s292 + $0x338] sm:$0xff] %v1440
        %1697 = vst [vmem:[%s292 + $0x340] sm:$0xff] %v1441
        %1698 = vst [vmem:[%s292 + $0x348] sm:$0xff] %v1442
        %1699 = vst [vmem:[%s292 + $0x350] sm:$0xff] %v1443
        %1700 = vst [vmem:[%s292 + $0x358] sm:$0xff] %v1444
        %1701 = vst [vmem:[%s292 + $0x360] sm:$0xff] %v1445
        %1702 = vst [vmem:[%s292 + $0x368] sm:$0xff] %v1446
        %1703 = vst [vmem:[%s292 + $0x370] sm:$0xff] %v1447
        %1704 = vst [vmem:[%s292 + $0x378] sm:$0xff] %v1448
        %1705 = vst [vmem:[%s292 + $0x380] sm:$0xff] %v1449
        %1706 = vst [vmem:[%s292 + $0x388] sm:$0xff] %v1450
        %1707 = vst [vmem:[%s292 + $0x390] sm:$0xff] %v1451
        %1708 = vst [vmem:[%s292 + $0x398] sm:$0xff] %v1452
        %1709 = vst [vmem:[%s292 + $0x3a0] sm:$0xff] %v1453
        %1710 = vst [vmem:[%s292 + $0x3a8] sm:$0xff] %v1454
        %1711 = vst [vmem:[%s292 + $0x3b0] sm:$0xff] %v1455
        %1712 = vst [vmem:[%s292 + $0x3b8] sm:$0xff] %v1456
        %1713 = vst [vmem:[%s292 + $0x3c0] sm:$0xff] %v1457
        %1714 = vst [vmem:[%s292 + $0x3c8] sm:$0xff] %v1458
        %1715 = vst [vmem:[%s292 + $0x3d0] sm:$0xff] %v1459
        %1716 = vst [vmem:[%s292 + $0x3d8] sm:$0xff] %v1460
        %1717 = vst [vmem:[%s292 + $0x3e0] sm:$0xff] %v1461
        %1718 = vst [vmem:[%s292 + $0x3e8] sm:$0xff] %v1462
        %1719 = vst [vmem:[%s292 + $0x3f0] sm:$0xff] %v1463
        %1720 = vst [vmem:[%s292 + $0x3f8] sm:$0xff] %v1464
        %1721 = vst [vmem:[%s292 + $0x400] sm:$0xff] %v1465
        %1722 = vst [vmem:[%s292 + $0x408] sm:$0xff] %v1466
        %1723 = vst [vmem:[%s292 + $0x410] sm:$0xff] %v1467
        %1724 = vst [vmem:[%s292 + $0x418] sm:$0xff] %v1468
        %1725 = vst [vmem:[%s292 + $0x420] sm:$0xff] %v1469
        %1726 = vst [vmem:[%s292 + $0x428] sm:$0xff] %v1470
        %1727 = vst [vmem:[%s292 + $0x430] sm:$0xff] %v1471
        %1728 = vst [vmem:[%s292 + $0x438] sm:$0xff] %v1472
        %1729 = vst [vmem:[%s292 + $0x440] sm:$0xff] %v1473
        %1730 = vst [vmem:[%s292 + $0x448] sm:$0xff] %v1474
        %1731 = vst [vmem:[%s292 + $0x450] sm:$0xff] %v1475
        %1732 = vst [vmem:[%s292 + $0x458] sm:$0xff] %v1476
        %1733 = vst [vmem:[%s292 + $0x460] sm:$0xff] %v1477
        %1734 = vst [vmem:[%s292 + $0x468] sm:$0xff] %v1478
        %1735 = vst [vmem:[%s292 + $0x470] sm:$0xff] %v1479
        %1736 = vst [vmem:[%s292 + $0x478] sm:$0xff] %v1480
        %1737 = vst [vmem:[%s292 + $0x480] sm:$0xff] %v1481
        %1738 = vst [vmem:[%s292 + $0x488] sm:$0xff] %v1482
        %1739 = vst [vmem:[%s292 + $0x490] sm:$0xff] %v1483
        %1740 = vst [vmem:[%s292 + $0x498] sm:$0xff] %v1484
        %1741 = vst [vmem:[%s292 + $0x4a0] sm:$0xff] %v1485
        %1742 = vst [vmem:[%s292 + $0x4a8] sm:$0xff] %v1486
        %1743 = vst [vmem:[%s292 + $0x4b0] sm:$0xff] %v1487
        %1744 = vst [vmem:[%s292 + $0x4b8] sm:$0xff] %v1488
        %1745 = vst [vmem:[%s292 + $0x4c0] sm:$0xff] %v1489
        %1746 = vst [vmem:[%s292 + $0x4c8] sm:$0xff] %v1490
        %1747 = vst [vmem:[%s292 + $0x4d0] sm:$0xff] %v1491
        %1748 = vst [vmem:[%s292 + $0x4d8] sm:$0xff] %v1492
        %1749 = vst [vmem:[%s292 + $0x4e0] sm:$0xff] %v1493
        %1750 = vst [vmem:[%s292 + $0x4e8] sm:$0xff] %v1494
        %1751 = vst [vmem:[%s292 + $0x4f0] sm:$0xff] %v1495
        %1752 = vst [vmem:[%s292 + $0x4f8] sm:$0xff] %v1496
        %1753 = vst [vmem:[%s292 + $0x500] sm:$0xff] %v1497
        %1754 = vst [vmem:[%s292 + $0x508] sm:$0xff] %v1498
        %1755 = vst [vmem:[%s292 + $0x510] sm:$0xff] %v1499
        %1756 = vst [vmem:[%s292 + $0x518] sm:$0xff] %v1500
        %1757 = vst [vmem:[%s292 + $0x520] sm:$0xff] %v1501
        %1758 = vst [vmem:[%s292 + $0x528] sm:$0xff] %v1502
        %1759 = vst [vmem:[%s292 + $0x530] sm:$0xff] %v1503
        %1760 = vst [vmem:[%s292 + $0x538] sm:$0xff] %v1504
        %1761 = vst [vmem:[%s292 + $0x540] sm:$0xff] %v1505
        %1762 = vst [vmem:[%s292 + $0x548] sm:$0xff] %v1506
        %1763 = vst [vmem:[%s292 + $0x550] sm:$0xff] %v1507
        %1764 = vst [vmem:[%s292 + $0x558] sm:$0xff] %v1508
        %1765 = vst [vmem:[%s292 + $0x560] sm:$0xff] %v1509
        %1766 = vst [vmem:[%s292 + $0x568] sm:$0xff] %v1510
        %1767 = vst [vmem:[%s292 + $0x570] sm:$0xff] %v1511
        %1768 = vst [vmem:[%s292 + $0x578] sm:$0xff] %v1512
        %1769 = vst [vmem:[%s292 + $0x580] sm:$0xff] %v1513
        %1770 = vst [vmem:[%s292 + $0x588] sm:$0xff] %v1514
        %1771 = vst [vmem:[%s292 + $0x590] sm:$0xff] %v1515
        %1772 = vst [vmem:[%s292 + $0x598] sm:$0xff] %v1516
        %1773 = vst [vmem:[%s292 + $0x5a0] sm:$0xff] %v1517
        %1774 = vst [vmem:[%s292 + $0x5a8] sm:$0xff] %v1518
        %1775 = vst [vmem:[%s292 + $0x5b0] sm:$0xff] %v1519
        %1776 = vst [vmem:[%s292 + $0x5b8] sm:$0xff] %v1520
        %1777 = vst [vmem:[%s292 + $0x5c0] sm:$0xff] %v1521
        %1778 = vst [vmem:[%s292 + $0x5c8] sm:$0xff] %v1522
        %1779 = vst [vmem:[%s292 + $0x5d0] sm:$0xff] %v1523
        %1780 = vst [vmem:[%s292 + $0x5d8] sm:$0xff] %v1524
        %1781 = vst [vmem:[%s292 + $0x5e0] sm:$0xff] %v1525
        %1782 = vst [vmem:[%s292 + $0x5e8] sm:$0xff] %v1526
        %1783 = vst [vmem:[%s292 + $0x5f0] sm:$0xff] %v1527
        %1784 = vst [vmem:[%s292 + $0x5f8] sm:$0xff] %v1528
        %1785 = vst [vmem:[%s292 + $0x600] sm:$0xff] %v1529
        %1786 = vst [vmem:[%s292 + $0x608] sm:$0xff] %v1530
        %1787 = vst [vmem:[%s292 + $0x610] sm:$0xff] %v1531
        %1788 = vst [vmem:[%s292 + $0x618] sm:$0xff] %v1532
        %1789 = vst [vmem:[%s292 + $0x620] sm:$0xff] %v1533
        %1790 = vst [vmem:[%s292 + $0x628] sm:$0xff] %v1534
        %1791 = vst [vmem:[%s292 + $0x630] sm:$0xff] %v1535
        %1792 = vst [vmem:[%s292 + $0x638] sm:$0xff] %v1536
        %1793 = vst [vmem:[%s292 + $0x640] sm:$0xff] %v1537
        %1794 = vst [vmem:[%s292 + $0x648] sm:$0xff] %v1538
        %1795 = vst [vmem:[%s292 + $0x650] sm:$0xff] %v1539
        %1796 = vst [vmem:[%s292 + $0x658] sm:$0xff] %v1540
        %1797 = vst [vmem:[%s292 + $0x660] sm:$0xff] %v1541
        %1798 = vst [vmem:[%s292 + $0x668] sm:$0xff] %v1542
        %1799 = vst [vmem:[%s292 + $0x670] sm:$0xff] %v1543
        %1800 = vst [vmem:[%s292 + $0x678] sm:$0xff] %v1544
        %1801 = vst [vmem:[%s292 + $0x680] sm:$0xff] %v1545
        %1802 = vst [vmem:[%s292 + $0x688] sm:$0xff] %v1546
        %1803 = vst [vmem:[%s292 + $0x690] sm:$0xff] %v1547
        %1804 = vst [vmem:[%s292 + $0x698] sm:$0xff] %v1548
        %1805 = vst [vmem:[%s292 + $0x6a0] sm:$0xff] %v1549
        %1806 = vst [vmem:[%s292 + $0x6a8] sm:$0xff] %v1550
        %1807 = vst [vmem:[%s292 + $0x6b0] sm:$0xff] %v1551
        %1808 = vst [vmem:[%s292 + $0x6b8] sm:$0xff] %v1552
        %1809 = vst [vmem:[%s292 + $0x6c0] sm:$0xff] %v1553
        %1810 = vst [vmem:[%s292 + $0x6c8] sm:$0xff] %v1554
        %1811 = vst [vmem:[%s292 + $0x6d0] sm:$0xff] %v1555
        %1812 = vst [vmem:[%s292 + $0x6d8] sm:$0xff] %v1556
        %1813 = vst [vmem:[%s292 + $0x6e0] sm:$0xff] %v1557
        %1814 = vst [vmem:[%s292 + $0x6e8] sm:$0xff] %v1558
        %1815 = vst [vmem:[%s292 + $0x6f0] sm:$0xff] %v1559
        %1816 = vst [vmem:[%s292 + $0x6f8] sm:$0xff] %v1560
        %1817 = vst [vmem:[%s292 + $0x700] sm:$0xff] %v1561
        %1818 = vst [vmem:[%s292 + $0x708] sm:$0xff] %v1562
        %1819 = vst [vmem:[%s292 + $0x710] sm:$0xff] %v1563
        %1820 = vst [vmem:[%s292 + $0x718] sm:$0xff] %v1564
        %1821 = vst [vmem:[%s292 + $0x720] sm:$0xff] %v1565
        %1822 = vst [vmem:[%s292 + $0x728] sm:$0xff] %v1566
        %1823 = vst [vmem:[%s292 + $0x730] sm:$0xff] %v1567
        %1824 = vst [vmem:[%s292 + $0x738] sm:$0xff] %v1568
        %1825 = vst [vmem:[%s292 + $0x740] sm:$0xff] %v1569
        %1826 = vst [vmem:[%s292 + $0x748] sm:$0xff] %v1570
        %1827 = vst [vmem:[%s292 + $0x750] sm:$0xff] %v1571
        %1828 = vst [vmem:[%s292 + $0x758] sm:$0xff] %v1572
        %1829 = vst [vmem:[%s292 + $0x760] sm:$0xff] %v1573
        %1830 = vst [vmem:[%s292 + $0x768] sm:$0xff] %v1574
        %1831 = vst [vmem:[%s292 + $0x770] sm:$0xff] %v1575
        %1832 = vst [vmem:[%s292 + $0x778] sm:$0xff] %v1576
        %1833 = vst [vmem:[%s292 + $0x780] sm:$0xff] %v1577
        %1834 = vst [vmem:[%s292 + $0x788] sm:$0xff] %v1578
        %1835 = vst [vmem:[%s292 + $0x790] sm:$0xff] %v1579
        %1836 = vst [vmem:[%s292 + $0x798] sm:$0xff] %v1580
        %1837 = vst [vmem:[%s292 + $0x7a0] sm:$0xff] %v1581
        %1838 = vst [vmem:[%s292 + $0x7a8] sm:$0xff] %v1582
        %1839 = vst [vmem:[%s292 + $0x7b0] sm:$0xff] %v1583
        %1840 = vst [vmem:[%s292 + $0x7b8] sm:$0xff] %v1584
        %1841 = vst [vmem:[%s292 + $0x7c0] sm:$0xff] %v1585
        %1842 = vst [vmem:[%s292 + $0x7c8] sm:$0xff] %v1586
        %1843 = vst [vmem:[%s292 + $0x7d0] sm:$0xff] %v1587
        %1844 = vst [vmem:[%s292 + $0x7d8] sm:$0xff] %v1588
        %1845 = vst [vmem:[%s292 + $0x7e0] sm:$0xff] %v1589
        %1846 = vst [vmem:[%s292 + $0x7e8] sm:$0xff] %v1590
        %1847 = vst [vmem:[%s292 + $0x7f0] sm:$0xff] %v1591
        %1848 = vst [vmem:[%s292 + $0x7f8] sm:$0xff] %v1592
        %s1849 = sand.u32 %s109, 1
        %s1850 = scalar_lea.sflag [#allocation4], %s1849
        %s1851 = sand.u32 %s109, 1
        %s1852 = smul.addr %s1851, 2048
        %s1853 = scalar_lea.vmem [#allocation8], %s1852
        // Predicated region
        $region45: #{tpu_custom_call.1} parent=31 // pred_check
          %p1854 = pneg %p119
        $region46: #{tpu_custom_call.1} parent=31 // pred_check_branch
          %1856 = sbr.rel (%p1854) target = $region48
        $region47: #{tpu_custom_call.1} parent=31 // pred_region
          %s1857 = smul.u32 256, %s23
          %s1858 = ssub.s32 293, %s1857
          %p1859 = scmp.lt.s32.totalorder %s1858, 256
          %s1860 = scalar_select %p1859, %s1858, 256
          %s1861 = smul.u32 8, %s1860
          %s1862 = ssub.s32 2048, %s1861
          %s1863 = sshll.u32 %s1862, 4
          %1864 = vsyncadd %s1850, %s1863
          %p1865 = scmp.ne.s32.totalorder 0, %s1861
          %s1866 = smul.addr %s1857, 8
          %s1867 = scalar_lea.hbm %s3, %s1866
          %s1868 = smul.u32 8, %s1860
          %s1869 = sshll.u32 %s1853, 4
          %s1870 = int_to_ptr.vmem [resolvable:$true] %s1869
          %s1871 = sshll.u32 %s1867, 4
          %s1872 = int_to_ptr.hbm [resolvable:$true] %s1871
          %s1873 = sshll.u32 %s1868, 4
          %1877 = dma.vmem_to_hbm [thread:$0]  (%p1865), %s1870, %s1873, %s1872, %s1850, 128, 128, 8
        $region48: #{tpu_custom_call.1} parent=31 // pred_fallthru
          _
      $region32: #{tpu_custom_call.1} parent=5 // pred_fallthru
        _
      %p1878 = scmp.le.s32.totalorder 2, %s18
      // Predicated region
      $region49: #{tpu_custom_call.1} parent=5 // pred_check
        %p1879 = pneg %p1878
      $region50: #{tpu_custom_call.1} parent=5 // pred_check_branch
        %1881 = sbr.rel (%p1879) target = $region52
      $region51: #{tpu_custom_call.1} parent=5 // pred_region
        %s1882 = ssub.s32 %s18, 2
        // Predicated region
        $region53: #{tpu_custom_call.1} parent=51 // pred_check
          %p1883 = pneg %p125
        $region54: #{tpu_custom_call.1} parent=51 // pred_check_branch
          %1885 = sbr.rel (%p1883) target = $region56
        $region55: #{tpu_custom_call.1} parent=51 // pred_region
          %s1886 = sand.u32 %s110, 1
          %s1887 = scalar_lea.sflag [#allocation4], %s1886
          %s1888 = sand.u32 %s110, 1
          %s1889 = smul.addr %s1888, 2048
          %s1890 = scalar_lea.vmem [#allocation8], %s1889
          %1892 = dma.done %s1887, 32768
        $region56: #{tpu_custom_call.1} parent=51 // pred_fallthru
          _
      $region52: #{tpu_custom_call.1} parent=5 // pred_fallthru
        _
    $region6: #{tpu_custom_call.1} parent=1 // loop_footer
      %s22 = sadd.s32 1, %s18
    $region7: #{tpu_custom_call.1} parent=1 // loop_footer_branch
      %17 = sbr.rel target = $region3
    $region8: #{tpu_custom_call.1} parent=1 // loop_exit
      _
    %1893 = vsyncpa [#allocation3], 1
    %s1894 = scalar_lea.sflag [#allocation3], 1
    %1895 = vsyncpa %s1894, 1
    %1896 = vsyncpa [#allocation6], 1
    %s1897 = scalar_lea.sflag [#allocation6], 1
    %1898 = vsyncpa %s1897, 1
    %1899 = vsyncpa [#allocation4], 1
    %s1900 = scalar_lea.sflag [#allocation4], 1
    %1901 = vsyncpa %s1900, 1

</llo_original>
